<compile_context>
chip_gen: v5e
topology: v5e:2x2
jax: 0.10.0
libtpu: 0.0.40
codegen_flags: <defaults>
</compile_context>

<pallas_src>
import math

import jax
import jax.numpy as jnp
from jax.experimental import pallas as pl
from jax.experimental.pallas import tpu as pltpu


# ---------------------------------------------------------------------------
# Kernel
# ---------------------------------------------------------------------------
def _proj_head_kernel(x_ref,
                      w1_ref, c1_ref,
                      w2_ref, c2_ref,
                      w3_ref, c3_ref,
                      o_ref):
    # Layer 1: fused Linear + (eval-mode BN folded into w/c) + ReLU.
    # The f32 -> bf16 cast happens here (hidden under the MXU) instead of as a separate
    # wrapper-side XLA op that would re-read/write all of x in HBM.
    h = jnp.dot(x_ref[...].astype(jnp.bfloat16), w1_ref[...],
                preferred_element_type=jnp.float32) + c1_ref[...]
    h = jnp.maximum(h, 0.0)

    # Layer 2: Linear + BN + ReLU.
    h = jnp.dot(h.astype(jnp.bfloat16), w2_ref[...],
                preferred_element_type=jnp.float32) + c2_ref[...]
    h = jnp.maximum(h, 0.0)

    # Layer 3: Linear + BN (no ReLU).
    z = jnp.dot(h.astype(jnp.bfloat16), w3_ref[...],
                preferred_element_type=jnp.float32) + c3_ref[...]

    # F.normalize(z, dim=1) == z / max(||z||, 1e-12) == z * rsqrt(max(||z||^2, 1e-24))
    sumsq = jnp.sum(z * z, axis=1, keepdims=True)
    inv = jax.lax.rsqrt(jnp.maximum(sumsq, 1e-24))
    o_ref[...] = (z * inv).astype(o_ref.dtype)


# ---------------------------------------------------------------------------
# Wrapper
# ---------------------------------------------------------------------------
def _round_up(n, m):
    return ((n + m - 1) // m) * m


def _vmem_budget_bytes(block_b, in_dim, hidden_dim, out_dim, single_buffer_weights):
    """Scoped-VMEM budget from resident operands, capped at this chip's physical VMEM."""
    w_buf = 1 if single_buffer_weights else 2
    weights = w_buf * (in_dim * hidden_dim + hidden_dim * hidden_dim
                       + hidden_dim * out_dim) * 2          # bf16 weights
    vectors = w_buf * (2 * hidden_dim + out_dim) * 4        # f32 offsets
    x_tiles = 2 * block_b * in_dim * 4                      # f32 x tiles, double-buffered
    o_tiles = 2 * block_b * out_dim * 4                     # f32 out tiles, double-buffered
    act = 3 * block_b * hidden_dim * 4                      # in-kernel intermediates
    total = int((weights + vectors + x_tiles + o_tiles + act) * 1.25) + (4 << 20)
    try:
        cap = int(pltpu.get_tpu_info().vmem_capacity_bytes) - (8 << 20)
    except Exception:                      # hardware query unavailable -> conservative cap
        cap = 56 << 20                     # safe even on v7x (64 MiB per TensorCore)
    return max(32 << 20, min(total, cap))


def _invariant_spec(shape, single_buffer):
    """Grid-invariant operand: same block index every step, so Pallas DMAs it only once.
    Single-buffered (Buffered(1)) when supported, halving its resident VMEM footprint."""
    index_map = lambda i: (0,) * len(shape)
    if single_buffer:
        return pl.BlockSpec(shape, index_map, pipeline_mode=pl.Buffered(1))
    return pl.BlockSpec(shape, index_map)


def _build_forward(B, in_dim, hidden_dim, out_dim, block_b, single_buffer_weights):
    grid = (pl.cdiv(B, block_b),)
    in_specs = [
        pl.BlockSpec((block_b, in_dim), lambda i: (i, 0)),                 # x tile (f32)
        _invariant_spec((in_dim, hidden_dim), single_buffer_weights),      # w1 (bf16)
        _invariant_spec((1, hidden_dim), single_buffer_weights),           # c1 = b1*s1 + t1
        _invariant_spec((hidden_dim, hidden_dim), single_buffer_weights),  # w2
        _invariant_spec((1, hidden_dim), single_buffer_weights),           # c2
        _invariant_spec((hidden_dim, out_dim), single_buffer_weights),     # w3
        _invariant_spec((1, out_dim), single_buffer_weights),              # c3
    ]
    # out_dim == 128 in the real model -> lane-dense (unmasked) output stores.
    out_spec = pl.BlockSpec((block_b, out_dim), lambda i: (i, 0))

    return pl.pallas_call(
        _proj_head_kernel,
        out_shape=jax.ShapeDtypeStruct((B, out_dim), jnp.float32),
        grid_spec=pltpu.PrefetchScalarGridSpec(
            num_scalar_prefetch=0,
            grid=grid,
            in_specs=in_specs,
            out_specs=out_spec,
        ),
        compiler_params=pltpu.CompilerParams(
            dimension_semantics=("parallel",),
            vmem_limit_bytes=_vmem_budget_bytes(block_b, in_dim, hidden_dim, out_dim,
                                                single_buffer_weights),
        ),
    )


def projection_head_forward(x, params, *, block_b=512):
    """x: [B, in_dim] float32.  params: folded kernel params (see fold_params)."""
    B, in_dim = x.shape
    hidden_dim = params["w1"].shape[1]
    out_dim = params["w3"].shape[1]

    # Batch tile: multiple of 16 rows (bf16 sublane tile after the in-kernel cast), capped
    # so the grid keeps >= 2 steps (both v7x TensorCores get work).  Ragged batches use
    # Pallas's masked partial last block -- no wrapper-side jnp.pad HBM pass.
    block_b = max(16, _round_up(min(block_b, B), 16))
    if B >= 32:
        block_b = min(block_b, _round_up(pl.cdiv(B, 2), 16))

    args = (x, params["w1"], params["c1"], params["w2"], params["c2"],
            params["w3"], params["c3"])
    try:
        return _build_forward(B, in_dim, hidden_dim, out_dim, block_b, True)(*args)
    except Exception:
        # pipeline_mode=pl.Buffered(1) unsupported by this JAX -> default double-buffering.
        return _build_forward(B, in_dim, hidden_dim, out_dim, block_b, False)(*args)


# ---------------------------------------------------------------------------
# Parameters: PyTorch-style raw params, and folding into kernel params
# ---------------------------------------------------------------------------
def init_raw_params(key, in_dim, hidden_dim, out_dim):
    """PyTorch-style params: Linear weights stored as [in, out] + bias; BN (g, b, mu, var)."""
    ks = jax.random.split(key, 18)

    def linear(kw, kb, fi, fo):
        bound = 1.0 / math.sqrt(fi)
        w = jax.random.uniform(kw, (fi, fo), jnp.float32, -bound, bound)
        b = jax.random.uniform(kb, (fo,), jnp.float32, -bound, bound)
        return w, b

    def bn(k0, k1, k2, k3, dim):
        gamma = jax.random.uniform(k0, (dim,), jnp.float32, 0.5, 1.5)
        beta = jax.random.uniform(k1, (dim,), jnp.float32, -0.2, 0.2)
        mean = jax.random.uniform(k2, (dim,), jnp.float32, -0.2, 0.2)
        var = jax.random.uniform(k3, (dim,), jnp.float32, 0.5, 1.5)
        return gamma, beta, mean, var

    w1, b1 = linear(ks[0], ks[1], in_dim, hidden_dim)
    w2, b2 = linear(ks[2], ks[3], hidden_dim, hidden_dim)
    w3, b3 = linear(ks[4], ks[5], hidden_dim, out_dim)
    return dict(
        w1=w1, b1=b1, bn1=bn(ks[6], ks[7], ks[8], ks[9], hidden_dim),
        w2=w2, b2=b2, bn2=bn(ks[10], ks[11], ks[12], ks[13], hidden_dim),
        w3=w3, b3=b3, bn3=bn(ks[14], ks[15], ks[16], ks[17], out_dim),
    )


def fold_params(raw, eps=1e-5):
    """Fold Linear bias + eval-mode BN into the weights:
       ((x @ W + b) - mu) * g/sqrt(var+eps) + beta == x @ (W*s) + (b*s + t),
       s = g/sqrt(var+eps), t = beta - mu*s.  Weights -> bf16, offsets stay f32."""
    folded = {}
    for i in (1, 2, 3):
        w, b = raw[f"w{i}"], raw[f"b{i}"]
        gamma, beta, mean, var = raw[f"bn{i}"]
        s = gamma / jnp.sqrt(var + eps)
        t = beta - mean * s
        folded[f"w{i}"] = (w * s[None, :]).astype(jnp.bfloat16)
        folded[f"c{i}"] = (b * s + t)[None, :].astype(jnp.float32)
    return folded


# ---------------------------------------------------------------------------
# References
# ---------------------------------------------------------------------------
def reference_f32(x, raw, eps=1e-5):
    """Full-precision PyTorch-semantics reference (Linear -> BN eval -> ReLU ... -> normalize)."""
    h = x
    for i, relu in ((1, True), (2, True), (3, False)):
        gamma, beta, mean, var = raw[f"bn{i}"]
        h = h @ raw[f"w{i}"] + raw[f"b{i}"]
        h = (h - mean) * (gamma / jnp.sqrt(var + eps)) + beta
        if relu:
            h = jnp.maximum(h, 0.0)
    n = jnp.sqrt(jnp.sum(h * h, axis=1, keepdims=True))
    return h / jnp.maximum(n, 1e-12)


def reference_bf16(x, p):
    """Mirrors the kernel arithmetic exactly (bf16 matmul operands, f32 accumulation)."""
    h = jnp.dot(x.astype(jnp.bfloat16), p["w1"], preferred_element_type=jnp.float32) + p["c1"]
    h = jnp.maximum(h, 0.0)
    h = jnp.dot(h.astype(jnp.bfloat16), p["w2"], preferred_element_type=jnp.float32) + p["c2"]
    h = jnp.maximum(h, 0.0)
    z = jnp.dot(h.astype(jnp.bfloat16), p["w3"], preferred_element_type=jnp.float32) + p["c3"]
    inv = jax.lax.rsqrt(jnp.maximum(jnp.sum(z * z, axis=1, keepdims=True), 1e-24))
    return z * inv


# ---------------------------------------------------------------------------
# Self-test
# ---------------------------------------------------------------------------
if __name__ == "__main__":
    # Small shapes consistent with the module (scaled down from 2048/2048/128;
    # out_dim kept at 128 so the output block stays lane-dense).
    B, in_dim, hidden_dim, out_dim = 256, 128, 128, 128

    key = jax.random.PRNGKey(0)
    kx, kp = jax.random.split(key)
    x = jax.random.normal(kx, (B, in_dim), jnp.float32)
    raw = init_raw_params(kp, in_dim, hidden_dim, out_dim)
    folded = fold_params(raw)

    # block_b=64 -> 4 grid steps (exercises the pipelined batch tiling).
    out = projection_head_forward(x, folded, block_b=64)
    out = jax.block_until_ready(out)
    assert out.shape == (B, out_dim)

    ref_exact = reference_bf16(x, folded)   # same arithmetic as the kernel
    ref_full = reference_f32(x, raw)        # full-precision semantics
    assert jnp.allclose(out, ref_exact, atol=1e-4, rtol=1e-4), "mismatch vs bf16 reference"
    assert float(jnp.max(jnp.abs(out - ref_full))) < 5e-2, "mismatch vs f32 reference"

    # Ragged batch path: no wrapper-side pad; Pallas masks the partial last block.
    x2 = x[:50]
    out2 = jax.block_until_ready(projection_head_forward(x2, folded, block_b=64))
    assert out2.shape == (50, out_dim)
    assert jnp.allclose(out2, ref_exact[:50], atol=1e-4, rtol=1e-4), "ragged-batch mismatch"

    print("KERNEL_OK")
</pallas_src>

<mosaic_0001>
module attributes {stable_mosaic.version = 11 : i64} {
  func.func @_proj_head_kernel(%arg0: i32, %arg1: memref<64x128xf32, #tpu.memory_space<vmem>>, %arg2: memref<128x128xbf16, #tpu.memory_space<vmem>>, %arg3: memref<1x128xf32, #tpu.memory_space<vmem>>, %arg4: memref<128x128xbf16, #tpu.memory_space<vmem>>, %arg5: memref<1x128xf32, #tpu.memory_space<vmem>>, %arg6: memref<128x128xbf16, #tpu.memory_space<vmem>>, %arg7: memref<1x128xf32, #tpu.memory_space<vmem>>, %arg8: memref<64x128xf32, #tpu.memory_space<vmem>>) attributes {dimension_semantics = [#tpu.dimension_semantics<parallel>], iteration_bounds = array<i64: 4>, scalar_prefetch = 0 : i64, scratch_operands = 0 : i64, tpu.core_type = #tpu.core_type<tc>, window_params = [{transform_indices = @transform_0, window_bounds = array<i64: 64, 128>}, {pipeline_mode = #tpu.pipeline_mode<synchronous>, transform_indices = @transform_1, window_bounds = array<i64: 128, 128>}, {pipeline_mode = #tpu.pipeline_mode<synchronous>, transform_indices = @transform_2, window_bounds = array<i64: 1, 128>}, {pipeline_mode = #tpu.pipeline_mode<synchronous>, transform_indices = @transform_3, window_bounds = array<i64: 128, 128>}, {pipeline_mode = #tpu.pipeline_mode<synchronous>, transform_indices = @transform_4, window_bounds = array<i64: 1, 128>}, {pipeline_mode = #tpu.pipeline_mode<synchronous>, transform_indices = @transform_5, window_bounds = array<i64: 128, 128>}, {pipeline_mode = #tpu.pipeline_mode<synchronous>, transform_indices = @transform_6, window_bounds = array<i64: 1, 128>}, {transform_indices = @transform_7, window_bounds = array<i64: 64, 128>}]} {
    %c0 = arith.constant 0 : index
    %c0_0 = arith.constant 0 : index
    %0 = vector.load %arg1[%c0, %c0_0] : memref<64x128xf32, #tpu.memory_space<vmem>>, vector<64x128xf32>
    %1 = arith.truncf %0 : vector<64x128xf32> to vector<64x128xbf16>
    %c0_1 = arith.constant 0 : index
    %c0_2 = arith.constant 0 : index
    %2 = vector.load %arg2[%c0_1, %c0_2] : memref<128x128xbf16, #tpu.memory_space<vmem>>, vector<128x128xbf16>
    %cst = arith.constant dense<0.000000e+00> : vector<64x128xf32>
    %3 = tpu.matmul %1, %2, %cst {dimension_numbers = #tpu.dot_dimension_numbers<[1], [0], [0], [1], [0, 0, 1, 1], [], []>} : vector<64x128xbf16>, vector<128x128xbf16>, vector<64x128xf32> -> vector<64x128xf32>
    %c0_3 = arith.constant 0 : index
    %c0_4 = arith.constant 0 : index
    %4 = vector.load %arg3[%c0_3, %c0_4] : memref<1x128xf32, #tpu.memory_space<vmem>>, vector<1x128xf32>
    %5 = vector.broadcast %4 : vector<1x128xf32> to vector<64x128xf32>
    %6 = arith.addf %3, %5 : vector<64x128xf32>
    %cst_5 = arith.constant 0.000000e+00 : f32
    %7 = vector.broadcast %cst_5 : f32 to vector<64x128xf32>
    %8 = arith.maximumf %6, %7 : vector<64x128xf32>
    %9 = arith.truncf %8 : vector<64x128xf32> to vector<64x128xbf16>
    %c0_6 = arith.constant 0 : index
    %c0_7 = arith.constant 0 : index
    %10 = vector.load %arg4[%c0_6, %c0_7] : memref<128x128xbf16, #tpu.memory_space<vmem>>, vector<128x128xbf16>
    %cst_8 = arith.constant dense<0.000000e+00> : vector<64x128xf32>
    %11 = tpu.matmul %9, %10, %cst_8 {dimension_numbers = #tpu.dot_dimension_numbers<[1], [0], [0], [1], [0, 0, 1, 1], [], []>} : vector<64x128xbf16>, vector<128x128xbf16>, vector<64x128xf32> -> vector<64x128xf32>
    %c0_9 = arith.constant 0 : index
    %c0_10 = arith.constant 0 : index
    %12 = vector.load %arg5[%c0_9, %c0_10] : memref<1x128xf32, #tpu.memory_space<vmem>>, vector<1x128xf32>
    %13 = vector.broadcast %12 : vector<1x128xf32> to vector<64x128xf32>
    %14 = arith.addf %11, %13 : vector<64x128xf32>
    %cst_11 = arith.constant 0.000000e+00 : f32
    %15 = vector.broadcast %cst_11 : f32 to vector<64x128xf32>
    %16 = arith.maximumf %14, %15 : vector<64x128xf32>
    %17 = arith.truncf %16 : vector<64x128xf32> to vector<64x128xbf16>
    %c0_12 = arith.constant 0 : index
    %c0_13 = arith.constant 0 : index
    %18 = vector.load %arg6[%c0_12, %c0_13] : memref<128x128xbf16, #tpu.memory_space<vmem>>, vector<128x128xbf16>
    %cst_14 = arith.constant dense<0.000000e+00> : vector<64x128xf32>
    %19 = tpu.matmul %17, %18, %cst_14 {dimension_numbers = #tpu.dot_dimension_numbers<[1], [0], [0], [1], [0, 0, 1, 1], [], []>} : vector<64x128xbf16>, vector<128x128xbf16>, vector<64x128xf32> -> vector<64x128xf32>
    %c0_15 = arith.constant 0 : index
    %c0_16 = arith.constant 0 : index
    %20 = vector.load %arg7[%c0_15, %c0_16] : memref<1x128xf32, #tpu.memory_space<vmem>>, vector<1x128xf32>
    %21 = vector.broadcast %20 : vector<1x128xf32> to vector<64x128xf32>
    %22 = arith.addf %19, %21 : vector<64x128xf32>
    %23 = arith.mulf %22, %22 : vector<64x128xf32>
    %cst_17 = arith.constant dense<0.000000e+00> : vector<64xf32>
    %24 = vector.multi_reduction <add>, %23, %cst_17 [1] : vector<64x128xf32> to vector<64xf32>
    %25 = vector.shape_cast %24 : vector<64xf32> to vector<64x1xf32>
    %cst_18 = arith.constant 1.000000e-24 : f32
    %26 = vector.broadcast %cst_18 : f32 to vector<64x1xf32>
    %27 = arith.maximumf %25, %26 : vector<64x1xf32>
    %28 = math.rsqrt %27 : vector<64x1xf32>
    %29 = vector.broadcast %28 : vector<64x1xf32> to vector<64x128xf32>
    %30 = arith.mulf %22, %29 : vector<64x128xf32>
    %c0_19 = arith.constant 0 : index
    %c0_20 = arith.constant 0 : index
    %31 = vector.load %arg8[%c0_19, %c0_20] : memref<64x128xf32, #tpu.memory_space<vmem>>, vector<64x128xf32>
    tpu.vector_store %arg8[%c0_19, %c0_20], %30 {strides = array<i32>} : memref<64x128xf32, #tpu.memory_space<vmem>>, vector<64x128xf32>,
    return
  }
  func.func @transform_0(%arg0: i32) -> (i32, i32) {
    %c0_i32 = arith.constant 0 : i32
    %c0_i32_0 = arith.constant 0 : i32
    return %arg0, %c0_i32 : i32, i32
  }
  func.func @transform_1(%arg0: i32) -> (i32, i32) {
    %c0_i32 = arith.constant 0 : i32
    %c0_i32_0 = arith.constant 0 : i32
    %c0_i32_1 = arith.constant 0 : i32
    return %c0_i32, %c0_i32_0 : i32, i32
  }
  func.func @transform_2(%arg0: i32) -> (i32, i32) {
    %c0_i32 = arith.constant 0 : i32
    %c0_i32_0 = arith.constant 0 : i32
    %c0_i32_1 = arith.constant 0 : i32
    return %c0_i32, %c0_i32_0 : i32, i32
  }
  func.func @transform_3(%arg0: i32) -> (i32, i32) {
    %c0_i32 = arith.constant 0 : i32
    %c0_i32_0 = arith.constant 0 : i32
    %c0_i32_1 = arith.constant 0 : i32
    return %c0_i32, %c0_i32_0 : i32, i32
  }
  func.func @transform_4(%arg0: i32) -> (i32, i32) {
    %c0_i32 = arith.constant 0 : i32
    %c0_i32_0 = arith.constant 0 : i32
    %c0_i32_1 = arith.constant 0 : i32
    return %c0_i32, %c0_i32_0 : i32, i32
  }
  func.func @transform_5(%arg0: i32) -> (i32, i32) {
    %c0_i32 = arith.constant 0 : i32
    %c0_i32_0 = arith.constant 0 : i32
    %c0_i32_1 = arith.constant 0 : i32
    return %c0_i32, %c0_i32_0 : i32, i32
  }
  func.func @transform_6(%arg0: i32) -> (i32, i32) {
    %c0_i32 = arith.constant 0 : i32
    %c0_i32_0 = arith.constant 0 : i32
    %c0_i32_1 = arith.constant 0 : i32
    return %c0_i32, %c0_i32_0 : i32, i32
  }
  func.func @transform_7(%arg0: i32) -> (i32, i32) {
    %c0_i32 = arith.constant 0 : i32
    %c0_i32_0 = arith.constant 0 : i32
    return %arg0, %c0_i32 : i32, i32
  }
}

module attributes {stable_mosaic.version = 11 : i64} {
  func.func @_proj_head_kernel(%arg0: i32, %arg1: memref<64x128xf32, #tpu.memory_space<vmem>>, %arg2: memref<128x128xbf16, #tpu.memory_space<vmem>>, %arg3: memref<1x128xf32, #tpu.memory_space<vmem>>, %arg4: memref<128x128xbf16, #tpu.memory_space<vmem>>, %arg5: memref<1x128xf32, #tpu.memory_space<vmem>>, %arg6: memref<128x128xbf16, #tpu.memory_space<vmem>>, %arg7: memref<1x128xf32, #tpu.memory_space<vmem>>, %arg8: memref<64x128xf32, #tpu.memory_space<vmem>>) attributes {dimension_semantics = [#tpu.dimension_semantics<parallel>], iteration_bounds = array<i64: 4>, scalar_prefetch = 0 : i64, scratch_operands = 0 : i64, tpu.core_type = #tpu.core_type<tc>, window_params = [{transform_indices = @transform_0, window_bounds = array<i64: 64, 128>}, {pipeline_mode = #tpu.pipeline_mode<synchronous>, transform_indices = @transform_1, window_bounds = array<i64: 128, 128>}, {pipeline_mode = #tpu.pipeline_mode<synchronous>, transform_indices = @transform_2, window_bounds = array<i64: 1, 128>}, {pipeline_mode = #tpu.pipeline_mode<synchronous>, transform_indices = @transform_3, window_bounds = array<i64: 128, 128>}, {pipeline_mode = #tpu.pipeline_mode<synchronous>, transform_indices = @transform_4, window_bounds = array<i64: 1, 128>}, {pipeline_mode = #tpu.pipeline_mode<synchronous>, transform_indices = @transform_5, window_bounds = array<i64: 128, 128>}, {pipeline_mode = #tpu.pipeline_mode<synchronous>, transform_indices = @transform_6, window_bounds = array<i64: 1, 128>}, {transform_indices = @transform_7, window_bounds = array<i64: 64, 128>}]} {
    %c0 = arith.constant 0 : index
    %c0_0 = arith.constant 0 : index
    %0 = vector.load %arg1[%c0, %c0_0] : memref<64x128xf32, #tpu.memory_space<vmem>>, vector<64x128xf32>
    %1 = arith.truncf %0 : vector<64x128xf32> to vector<64x128xbf16>
    %c0_1 = arith.constant 0 : index
    %c0_2 = arith.constant 0 : index
    %2 = vector.load %arg2[%c0_1, %c0_2] : memref<128x128xbf16, #tpu.memory_space<vmem>>, vector<128x128xbf16>
    %cst = arith.constant dense<0.000000e+00> : vector<64x128xf32>
    %3 = tpu.matmul %1, %2, %cst {dimension_numbers = #tpu.dot_dimension_numbers<[1], [0], [0], [1], [0, 0, 1, 1], [], []>} : vector<64x128xbf16>, vector<128x128xbf16>, vector<64x128xf32> -> vector<64x128xf32>
    %c0_3 = arith.constant 0 : index
    %c0_4 = arith.constant 0 : index
    %4 = vector.load %arg3[%c0_3, %c0_4] : memref<1x128xf32, #tpu.memory_space<vmem>>, vector<1x128xf32>
    %5 = vector.broadcast %4 : vector<1x128xf32> to vector<64x128xf32>
    %6 = arith.addf %3, %5 : vector<64x128xf32>
    %cst_5 = arith.constant 0.000000e+00 : f32
    %7 = vector.broadcast %cst_5 : f32 to vector<64x128xf32>
    %8 = arith.maximumf %6, %7 : vector<64x128xf32>
    %9 = arith.truncf %8 : vector<64x128xf32> to vector<64x128xbf16>
    %c0_6 = arith.constant 0 : index
    %c0_7 = arith.constant 0 : index
    %10 = vector.load %arg4[%c0_6, %c0_7] : memref<128x128xbf16, #tpu.memory_space<vmem>>, vector<128x128xbf16>
    %cst_8 = arith.constant dense<0.000000e+00> : vector<64x128xf32>
    %11 = tpu.matmul %9, %10, %cst_8 {dimension_numbers = #tpu.dot_dimension_numbers<[1], [0], [0], [1], [0, 0, 1, 1], [], []>} : vector<64x128xbf16>, vector<128x128xbf16>, vector<64x128xf32> -> vector<64x128xf32>
    %c0_9 = arith.constant 0 : index
    %c0_10 = arith.constant 0 : index
    %12 = vector.load %arg5[%c0_9, %c0_10] : memref<1x128xf32, #tpu.memory_space<vmem>>, vector<1x128xf32>
    %13 = vector.broadcast %12 : vector<1x128xf32> to vector<64x128xf32>
    %14 = arith.addf %11, %13 : vector<64x128xf32>
    %cst_11 = arith.constant 0.000000e+00 : f32
    %15 = vector.broadcast %cst_11 : f32 to vector<64x128xf32>
    %16 = arith.maximumf %14, %15 : vector<64x128xf32>
    %17 = arith.truncf %16 : vector<64x128xf32> to vector<64x128xbf16>
    %c0_12 = arith.constant 0 : index
    %c0_13 = arith.constant 0 : index
    %18 = vector.load %arg6[%c0_12, %c0_13] : memref<128x128xbf16, #tpu.memory_space<vmem>>, vector<128x128xbf16>
    %cst_14 = arith.constant dense<0.000000e+00> : vector<64x128xf32>
    %19 = tpu.matmul %17, %18, %cst_14 {dimension_numbers = #tpu.dot_dimension_numbers<[1], [0], [0], [1], [0, 0, 1, 1], [], []>} : vector<64x128xbf16>, vector<128x128xbf16>, vector<64x128xf32> -> vector<64x128xf32>
    %c0_15 = arith.constant 0 : index
    %c0_16 = arith.constant 0 : index
    %20 = vector.load %arg7[%c0_15, %c0_16] : memref<1x128xf32, #tpu.memory_space<vmem>>, vector<1x128xf32>
    %21 = vector.broadcast %20 : vector<1x128xf32> to vector<64x128xf32>
    %22 = arith.addf %19, %21 : vector<64x128xf32>
    %23 = arith.mulf %22, %22 : vector<64x128xf32>
    %cst_17 = arith.constant dense<0.000000e+00> : vector<64xf32>
    %24 = vector.multi_reduction <add>, %23, %cst_17 [1] : vector<64x128xf32> to vector<64xf32>
    %25 = vector.shape_cast %24 : vector<64xf32> to vector<64x1xf32>
    %cst_18 = arith.constant 1.000000e-24 : f32
    %26 = vector.broadcast %cst_18 : f32 to vector<64x1xf32>
    %27 = arith.maximumf %25, %26 : vector<64x1xf32>
    %28 = math.rsqrt %27 : vector<64x1xf32>
    %29 = vector.broadcast %28 : vector<64x1xf32> to vector<64x128xf32>
    %30 = arith.mulf %22, %29 : vector<64x128xf32>
    %c0_19 = arith.constant 0 : index
    %c0_20 = arith.constant 0 : index
    %31 = vector.load %arg8[%c0_19, %c0_20] : memref<64x128xf32, #tpu.memory_space<vmem>>, vector<64x128xf32>
    tpu.vector_store %arg8[%c0_19, %c0_20], %30 {strides = array<i32>} : memref<64x128xf32, #tpu.memory_space<vmem>>, vector<64x128xf32>,
    return
  }
  func.func @transform_0(%arg0: i32) -> (i32, i32) {
    %c0_i32 = arith.constant 0 : i32
    %c0_i32_0 = arith.constant 0 : i32
    return %arg0, %c0_i32 : i32, i32
  }
  func.func @transform_1(%arg0: i32) -> (i32, i32) {
    %c0_i32 = arith.constant 0 : i32
    %c0_i32_0 = arith.constant 0 : i32
    %c0_i32_1 = arith.constant 0 : i32
    return %c0_i32, %c0_i32_0 : i32, i32
  }
  func.func @transform_2(%arg0: i32) -> (i32, i32) {
    %c0_i32 = arith.constant 0 : i32
    %c0_i32_0 = arith.constant 0 : i32
    %c0_i32_1 = arith.constant 0 : i32
    return %c0_i32, %c0_i32_0 : i32, i32
  }
  func.func @transform_3(%arg0: i32) -> (i32, i32) {
    %c0_i32 = arith.constant 0 : i32
    %c0_i32_0 = arith.constant 0 : i32
    %c0_i32_1 = arith.constant 0 : i32
    return %c0_i32, %c0_i32_0 : i32, i32
  }
  func.func @transform_4(%arg0: i32) -> (i32, i32) {
    %c0_i32 = arith.constant 0 : i32
    %c0_i32_0 = arith.constant 0 : i32
    %c0_i32_1 = arith.constant 0 : i32
    return %c0_i32, %c0_i32_0 : i32, i32
  }
  func.func @transform_5(%arg0: i32) -> (i32, i32) {
    %c0_i32 = arith.constant 0 : i32
    %c0_i32_0 = arith.constant 0 : i32
    %c0_i32_1 = arith.constant 0 : i32
    return %c0_i32, %c0_i32_0 : i32, i32
  }
  func.func @transform_6(%arg0: i32) -> (i32, i32) {
    %c0_i32 = arith.constant 0 : i32
    %c0_i32_0 = arith.constant 0 : i32
    %c0_i32_1 = arith.constant 0 : i32
    return %c0_i32, %c0_i32_0 : i32, i32
  }
  func.func @transform_7(%arg0: i32) -> (i32, i32) {
    %c0_i32 = arith.constant 0 : i32
    %c0_i32_0 = arith.constant 0 : i32
    return %arg0, %c0_i32 : i32, i32
  }
}

</mosaic_0001>

<llo_original>
// kernel: tpu_custom_call.1
$region0: #{tpu_custom_call.1}
  #allocation0 [shape = 'u32[]', space=smem, size = 0x4, offset = 0x4, fixed_abs, tag = 'smem constant byte address 0x4 - core index']
  #allocation1 [shape = 'u32[72,128]{1,0:T(1,128)}', space=vmem, size = 0x9000, scoped, tag = 'internal scratch']
  %s0 = inlined_call_operand.hbm [shape: f32[256,128], index: 0, kind: input, shape index: {}]
  %s1 = inlined_call_operand.hbm [shape: bf16[128,128], index: 1, kind: input, shape index: {}]
  %s2 = inlined_call_operand.vmem [shape: f32[1,128], index: 2, kind: input, shape index: {}]
  %s3 = inlined_call_operand.hbm [shape: bf16[128,128], index: 3, kind: input, shape index: {}]
  %s4 = inlined_call_operand.vmem [shape: f32[1,128], index: 4, kind: input, shape index: {}]
  %s5 = inlined_call_operand.hbm [shape: bf16[128,128], index: 5, kind: input, shape index: {}]
  %s6 = inlined_call_operand.vmem [shape: f32[1,128], index: 6, kind: input, shape index: {}]
  %s7 = inlined_call_operand.hbm [shape: f32[256,128], index: 7, kind: output, shape index: {}]
  %s8 = sld [smem:[#allocation0]]
  $region77: #{tpu_custom_call.1} parent=0
    _
  %s10 = ssub.s32 1, %s8
  %s11 = scalar_select 0, %s10, %s8
  $region1: #{tpu_custom_call.1} parent=0
    #allocation2 [shape = 'u8[65536]{0}', space=vmem, size = 0x10000, scoped, tag = 'input window, operand 0']
    #allocation3 [shape = 's32[2]{0}', space=sflag, size = 0x8, scoped, tag = 'scoped memory for tpu_custom_call.1']
    #allocation4 [shape = 's32[2]{0}', space=sflag, size = 0x8, scoped, tag = 'scoped memory for tpu_custom_call.1']
    #allocation5 [shape = 'u8[32768]{0}', space=vmem, size = 0x8000, scoped, tag = 'input window, operand 1, single buffered']
    #allocation6 [shape = 's32[1]{0}', space=sflag, size = 0x4, scoped, tag = 'scoped memory for tpu_custom_call.1']
    #allocation7 [shape = 'u8[32768]{0}', space=vmem, size = 0x8000, scoped, tag = 'input window, operand 3, single buffered']
    #allocation8 [shape = 'u8[32768]{0}', space=vmem, size = 0x8000, scoped, tag = 'input window, operand 5, single buffered']
    #allocation9 [shape = 's32[1]{0}', space=sflag, size = 0x4, scoped, tag = 'scoped memory for tpu_custom_call.1']
    #allocation10 [shape = 'u8[65536]{0}', space=vmem, size = 0x10000, scoped, tag = 'output window, operand 0']
    %12 = vsyncpa [#allocation3], 0
    %s13 = scalar_lea.sflag [#allocation3], 1
    %14 = vsyncpa %s13, 0
    %15 = vsyncpa [#allocation6], 0
    %16 = vsyncpa [#allocation9], 0
    %17 = vsyncpa [#allocation4], 0
    %s18 = scalar_lea.sflag [#allocation4], 1
    %19 = vsyncpa %s18, 0
    loop: start=0, step=1, limit=6
    $region2: #{tpu_custom_call.1} parent=1 // loop_pre_header
      _
    $region3: #{tpu_custom_call.1} parent=1 // loop_header
      %s21 = sphi 0, %s25
      %p22 = scmp.ge.s32.totalorder %s21, 6
      %s31 = sphi 0, %s33
      %s34 = sphi 0, %s31
      %s35 = sphi 0, %s34
      %s51 = sphi 0, %s35
      %s55 = sphi 0, %s55
      %s57 = sphi 0, %s55
      %s58 = sphi 0, %s57
      %s72 = sphi 0, %s58
      %s76 = sphi 0, %s76
      %s78 = sphi 0, %s76
      %s79 = sphi 0, %s78
      %s93 = sphi 0, %s79
      %s97 = sphi 0, %s97
      %s99 = sphi 0, %s97
      %s100 = sphi 0, %s99
      %s114 = sphi 0, %s100
      %s118 = sphi 0, %s118
      %s120 = sphi 0, %s118
      %s121 = sphi 0, %s120
      %s135 = sphi 0, %s121
      %s139 = sphi 0, %s139
      %s141 = sphi 0, %s139
      %s142 = sphi 0, %s141
      %s156 = sphi 0, %s142
      %s160 = sphi 0, %s160
      %s162 = sphi 0, %s160
      %s163 = sphi 0, %s162
      %s177 = sphi 0, %s163
      %s183 = sphi 0, %s185
      %s186 = sphi 0, %s183
      %s187 = sphi 0, %s186
      %s203 = sphi 0, %s187
    $region4: #{tpu_custom_call.1} parent=1 // loop_header_branch
      %24 = sbr.rel (%p22) target = $region8
    $region5: #{tpu_custom_call.1} parent=1 // loop_body
      %s26 = ssub.s32 %s21, 1
      %s27 = ssub.s32 %s21, 2
      %s28 = sadd.s32 %s21, 1
      %s29 = ssub.s32 %s21, %s28
      %p30 = scmp.eq.s32.totalorder %s29, 0
      %s32 = sadd.s32 %s31, 1
      %s33 = scalar_select %p30, %s31, %s32
      %p36 = pneg %p30
      %p37 = scmp.eq.s32.totalorder %s21, 3
      %p38 = por %p36, %p37
      %p39 = scmp.ne.s32.totalorder %s31, %s34
      %p40 = scmp.eq.s32.totalorder %s21, 0
      %p41 = por %p39, %p40
      %p42 = scmp.ne.s32.totalorder %s31, %s34
      %p43 = scmp.eq.s32.totalorder %s26, 3
      %p44 = por %p42, %p43
      %p45 = scmp.ne.s32.totalorder %s34, %s35
      %p46 = scmp.eq.s32.totalorder %s26, 0
      %p47 = por %p45, %p46
      %p48 = scmp.ne.s32.totalorder %s34, %s35
      %p49 = scmp.eq.s32.totalorder %s27, 3
      %p50 = por %p48, %p49
      %p52 = scmp.ne.s32.totalorder %s35, %s51
      %p53 = scmp.eq.s32.totalorder %s27, 0
      %p54 = por %p52, %p53
      %s56 = sadd.s32 %s55, 1
      %p59 = scmp.eq.s32.totalorder %s21, 3
      %p60 = scmp.ne.s32.totalorder %s55, %s57
      %p61 = scmp.eq.s32.totalorder %s21, 0
      %p62 = por %p60, %p61
      %p63 = scmp.ne.s32.totalorder %s55, %s57
      %p64 = scmp.eq.s32.totalorder %s26, 3
      %p65 = por %p63, %p64
      %p66 = scmp.ne.s32.totalorder %s57, %s58
      %p67 = scmp.eq.s32.totalorder %s26, 0
      %p68 = por %p66, %p67
      %p69 = scmp.ne.s32.totalorder %s57, %s58
      %p70 = scmp.eq.s32.totalorder %s27, 3
      %p71 = por %p69, %p70
      %p73 = scmp.ne.s32.totalorder %s58, %s72
      %p74 = scmp.eq.s32.totalorder %s27, 0
      %p75 = por %p73, %p74
      %s77 = sadd.s32 %s76, 1
      %p80 = scmp.eq.s32.totalorder %s21, 3
      %p81 = scmp.ne.s32.totalorder %s76, %s78
      %p82 = scmp.eq.s32.totalorder %s21, 0
      %p83 = por %p81, %p82
      %p84 = scmp.ne.s32.totalorder %s76, %s78
      %p85 = scmp.eq.s32.totalorder %s26, 3
      %p86 = por %p84, %p85
      %p87 = scmp.ne.s32.totalorder %s78, %s79
      %p88 = scmp.eq.s32.totalorder %s26, 0
      %p89 = por %p87, %p88
      %p90 = scmp.ne.s32.totalorder %s78, %s79
      %p91 = scmp.eq.s32.totalorder %s27, 3
      %p92 = por %p90, %p91
      %p94 = scmp.ne.s32.totalorder %s79, %s93
      %p95 = scmp.eq.s32.totalorder %s27, 0
      %p96 = por %p94, %p95
      %s98 = sadd.s32 %s97, 1
      %p101 = scmp.eq.s32.totalorder %s21, 3
      %p102 = scmp.ne.s32.totalorder %s97, %s99
      %p103 = scmp.eq.s32.totalorder %s21, 0
      %p104 = por %p102, %p103
      %p105 = scmp.ne.s32.totalorder %s97, %s99
      %p106 = scmp.eq.s32.totalorder %s26, 3
      %p107 = por %p105, %p106
      %p108 = scmp.ne.s32.totalorder %s99, %s100
      %p109 = scmp.eq.s32.totalorder %s26, 0
      %p110 = por %p108, %p109
      %p111 = scmp.ne.s32.totalorder %s99, %s100
      %p112 = scmp.eq.s32.totalorder %s27, 3
      %p113 = por %p111, %p112
      %p115 = scmp.ne.s32.totalorder %s100, %s114
      %p116 = scmp.eq.s32.totalorder %s27, 0
      %p117 = por %p115, %p116
      %s119 = sadd.s32 %s118, 1
      %p122 = scmp.eq.s32.totalorder %s21, 3
      %p123 = scmp.ne.s32.totalorder %s118, %s120
      %p124 = scmp.eq.s32.totalorder %s21, 0
      %p125 = por %p123, %p124
      %p126 = scmp.ne.s32.totalorder %s118, %s120
      %p127 = scmp.eq.s32.totalorder %s26, 3
      %p128 = por %p126, %p127
      %p129 = scmp.ne.s32.totalorder %s120, %s121
      %p130 = scmp.eq.s32.totalorder %s26, 0
      %p131 = por %p129, %p130
      %p132 = scmp.ne.s32.totalorder %s120, %s121
      %p133 = scmp.eq.s32.totalorder %s27, 3
      %p134 = por %p132, %p133
      %p136 = scmp.ne.s32.totalorder %s121, %s135
      %p137 = scmp.eq.s32.totalorder %s27, 0
      %p138 = por %p136, %p137
      %s140 = sadd.s32 %s139, 1
      %p143 = scmp.eq.s32.totalorder %s21, 3
      %p144 = scmp.ne.s32.totalorder %s139, %s141
      %p145 = scmp.eq.s32.totalorder %s21, 0
      %p146 = por %p144, %p145
      %p147 = scmp.ne.s32.totalorder %s139, %s141
      %p148 = scmp.eq.s32.totalorder %s26, 3
      %p149 = por %p147, %p148
      %p150 = scmp.ne.s32.totalorder %s141, %s142
      %p151 = scmp.eq.s32.totalorder %s26, 0
      %p152 = por %p150, %p151
      %p153 = scmp.ne.s32.totalorder %s141, %s142
      %p154 = scmp.eq.s32.totalorder %s27, 3
      %p155 = por %p153, %p154
      %p157 = scmp.ne.s32.totalorder %s142, %s156
      %p158 = scmp.eq.s32.totalorder %s27, 0
      %p159 = por %p157, %p158
      %s161 = sadd.s32 %s160, 1
      %p164 = scmp.eq.s32.totalorder %s21, 3
      %p165 = scmp.ne.s32.totalorder %s160, %s162
      %p166 = scmp.eq.s32.totalorder %s21, 0
      %p167 = por %p165, %p166
      %p168 = scmp.ne.s32.totalorder %s160, %s162
      %p169 = scmp.eq.s32.totalorder %s26, 3
      %p170 = por %p168, %p169
      %p171 = scmp.ne.s32.totalorder %s162, %s163
      %p172 = scmp.eq.s32.totalorder %s26, 0
      %p173 = por %p171, %p172
      %p174 = scmp.ne.s32.totalorder %s162, %s163
      %p175 = scmp.eq.s32.totalorder %s27, 3
      %p176 = por %p174, %p175
      %p178 = scmp.ne.s32.totalorder %s163, %s177
      %p179 = scmp.eq.s32.totalorder %s27, 0
      %p180 = por %p178, %p179
      %s181 = ssub.s32 %s21, %s28
      %p182 = scmp.eq.s32.totalorder %s181, 0
      %s184 = sadd.s32 %s183, 1
      %s185 = scalar_select %p182, %s183, %s184
      %p188 = pneg %p182
      %p189 = scmp.eq.s32.totalorder %s21, 3
      %p190 = por %p188, %p189
      %p191 = scmp.ne.s32.totalorder %s183, %s186
      %p192 = scmp.eq.s32.totalorder %s21, 0
      %p193 = por %p191, %p192
      %p194 = scmp.ne.s32.totalorder %s183, %s186
      %p195 = scmp.eq.s32.totalorder %s26, 3
      %p196 = por %p194, %p195
      %p197 = scmp.ne.s32.totalorder %s186, %s187
      %p198 = scmp.eq.s32.totalorder %s26, 0
      %p199 = por %p197, %p198
      %p200 = scmp.ne.s32.totalorder %s186, %s187
      %p201 = scmp.eq.s32.totalorder %s27, 3
      %p202 = por %p200, %p201
      %p204 = scmp.ne.s32.totalorder %s187, %s203
      %p205 = scmp.eq.s32.totalorder %s27, 0
      %p206 = por %p204, %p205
      %p207 = scmp.le.s32.totalorder 1, %s21
      %p208 = scmp.lt.s32.totalorder %s21, 5
      %p209 = pnand %p207, %p208
      %p210 = pneg %p209
      // Predicated region
      $region9: #{tpu_custom_call.1} parent=5 // pred_check
        _
      $region10: #{tpu_custom_call.1} parent=5 // pred_check_branch
        %212 = sbr.rel (%p209) target = $region12
      $region11: #{tpu_custom_call.1} parent=5 // pred_region
        %s213 = ssub.s32 %s21, 1
        // Predicated region
        $region13: #{tpu_custom_call.1} parent=11 // pred_check
          %p214 = pneg %p68
        $region14: #{tpu_custom_call.1} parent=11 // pred_check_branch
          %216 = sbr.rel (%p214) target = $region16
        $region15: #{tpu_custom_call.1} parent=11 // pred_region
          %218 = vsyncadd [#allocation6], 0
          %s219 = sshll.u32 %s1, 4
          %s220 = int_to_ptr.hbm [resolvable:$true] %s219
          %s221 = sshll.u32 [#allocation5], 4
          %s222 = int_to_ptr.vmem [resolvable:$true] %s221
          %227 = dma.hbm_to_vmem [thread:$0]  %s220, 1024, %s222, [#allocation6], 64, 64, 4
        $region16: #{tpu_custom_call.1} parent=11 // pred_fallthru
          _
        // Predicated region
        $region17: #{tpu_custom_call.1} parent=11 // pred_check
          %p228 = pneg %p89
        $region18: #{tpu_custom_call.1} parent=11 // pred_check_branch
          %230 = sbr.rel (%p228) target = $region20
        $region19: #{tpu_custom_call.1} parent=11 // pred_region
          _
        $region20: #{tpu_custom_call.1} parent=11 // pred_fallthru
          _
        // Predicated region
        $region21: #{tpu_custom_call.1} parent=11 // pred_check
          %p231 = pneg %p110
        $region22: #{tpu_custom_call.1} parent=11 // pred_check_branch
          %233 = sbr.rel (%p231) target = $region24
        $region23: #{tpu_custom_call.1} parent=11 // pred_region
          %235 = vsyncadd [#allocation6], 0
          %s236 = sshll.u32 %s3, 4
          %s237 = int_to_ptr.hbm [resolvable:$true] %s236
          %s238 = sshll.u32 [#allocation7], 4
          %s239 = int_to_ptr.vmem [resolvable:$true] %s238
          %244 = dma.hbm_to_vmem [thread:$0]  %s237, 1024, %s239, [#allocation6], 64, 64, 4
        $region24: #{tpu_custom_call.1} parent=11 // pred_fallthru
          _
        // Predicated region
        $region25: #{tpu_custom_call.1} parent=11 // pred_check
          %p245 = pneg %p131
        $region26: #{tpu_custom_call.1} parent=11 // pred_check_branch
          %247 = sbr.rel (%p245) target = $region28
        $region27: #{tpu_custom_call.1} parent=11 // pred_region
          _
        $region28: #{tpu_custom_call.1} parent=11 // pred_fallthru
          _
        // Predicated region
        $region29: #{tpu_custom_call.1} parent=11 // pred_check
          %p248 = pneg %p152
        $region30: #{tpu_custom_call.1} parent=11 // pred_check_branch
          %250 = sbr.rel (%p248) target = $region32
        $region31: #{tpu_custom_call.1} parent=11 // pred_region
          %252 = vsyncadd [#allocation9], 0
          %s253 = sshll.u32 %s5, 4
          %s254 = int_to_ptr.hbm [resolvable:$true] %s253
          %s255 = sshll.u32 [#allocation8], 4
          %s256 = int_to_ptr.vmem [resolvable:$true] %s255
          %261 = dma.hbm_to_vmem [thread:$0]  %s254, 1024, %s256, [#allocation9], 64, 64, 4
        $region32: #{tpu_custom_call.1} parent=11 // pred_fallthru
          _
        // Predicated region
        $region33: #{tpu_custom_call.1} parent=11 // pred_check
          %p262 = pneg %p173
        $region34: #{tpu_custom_call.1} parent=11 // pred_check_branch
          %264 = sbr.rel (%p262) target = $region36
        $region35: #{tpu_custom_call.1} parent=11 // pred_region
          _
        $region36: #{tpu_custom_call.1} parent=11 // pred_fallthru
          _
      $region12: #{tpu_custom_call.1} parent=5 // pred_fallthru
        _
      %p265 = scmp.lt.s32.totalorder %s21, 4
      // Predicated region
      $region37: #{tpu_custom_call.1} parent=5 // pred_check
        %p266 = pneg %p265
      $region38: #{tpu_custom_call.1} parent=5 // pred_check_branch
        %268 = sbr.rel (%p266) target = $region40
      $region39: #{tpu_custom_call.1} parent=5 // pred_region
        // Predicated region
        $region41: #{tpu_custom_call.1} parent=39 // pred_check
          %p269 = pneg %p41
        $region42: #{tpu_custom_call.1} parent=39 // pred_check_branch
          %271 = sbr.rel (%p269) target = $region44
        $region43: #{tpu_custom_call.1} parent=39 // pred_region
          %s272 = sand.u32 %s31, 1
          %s273 = scalar_lea.sflag [#allocation3], %s272
          %s274 = sand.u32 %s31, 1
          %s275 = smul.addr %s274, 64
          %s276 = scalar_lea.vmem [#allocation2], %s275
          %s277 = smul.u32 8, %s21
          %279 = vsyncadd %s273, 0
          %s280 = smul.addr %s277, 8
          %s281 = scalar_lea.hbm %s0, %s280
          %s282 = sshll.u32 %s281, 4
          %s283 = int_to_ptr.hbm [resolvable:$true] %s282
          %s284 = sshll.u32 %s276, 4
          %s285 = int_to_ptr.vmem [resolvable:$true] %s284
          %290 = dma.hbm_to_vmem [thread:$0]  %s283, 1024, %s285, %s273, 128, 128, 8
        $region44: #{tpu_custom_call.1} parent=39 // pred_fallthru
          _
      $region40: #{tpu_custom_call.1} parent=5 // pred_fallthru
        _
      %p291 = scmp.le.s32.totalorder 1, %s21
      %p292 = scmp.lt.s32.totalorder %s21, 5
      %p293 = pnand %p291, %p292
      %p294 = pneg %p293
      // Predicated region
      $region45: #{tpu_custom_call.1} parent=5 // pred_check
        _
      $region46: #{tpu_custom_call.1} parent=5 // pred_check_branch
        %296 = sbr.rel (%p293) target = $region48
      $region47: #{tpu_custom_call.1} parent=5 // pred_region
        %s297 = ssub.s32 %s21, 1
        %s298 = sand.u32 %s34, 1
        %s299 = scalar_lea.sflag [#allocation3], %s298
        %s300 = sand.u32 %s34, 1
        %s301 = smul.addr %s300, 64
        %s302 = scalar_lea.vmem [#allocation2], %s301
        // Predicated region
        $region49: #{tpu_custom_call.1} parent=47 // pred_check
          %p303 = pneg %p47
        $region50: #{tpu_custom_call.1} parent=47 // pred_check_branch
          %305 = sbr.rel (%p303) target = $region52
        $region51: #{tpu_custom_call.1} parent=47 // pred_region
          %307 = dma.done %s299, 1024
        $region52: #{tpu_custom_call.1} parent=47 // pred_fallthru
          _
        // Predicated region
        $region53: #{tpu_custom_call.1} parent=47 // pred_check
          %p308 = pneg %p68
        $region54: #{tpu_custom_call.1} parent=47 // pred_check_branch
          %310 = sbr.rel (%p308) target = $region56
        $region55: #{tpu_custom_call.1} parent=47 // pred_region
          %312 = dma.done [#allocation6], 1024
        $region56: #{tpu_custom_call.1} parent=47 // pred_fallthru
          _
        // Predicated region
        $region57: #{tpu_custom_call.1} parent=47 // pred_check
          %p313 = pneg %p110
        $region58: #{tpu_custom_call.1} parent=47 // pred_check_branch
          %315 = sbr.rel (%p313) target = $region60
        $region59: #{tpu_custom_call.1} parent=47 // pred_region
          %317 = dma.done [#allocation6], 1024
        $region60: #{tpu_custom_call.1} parent=47 // pred_fallthru
          _
        // Predicated region
        $region61: #{tpu_custom_call.1} parent=47 // pred_check
          %p318 = pneg %p152
        $region62: #{tpu_custom_call.1} parent=47 // pred_check_branch
          %320 = sbr.rel (%p318) target = $region64
        $region63: #{tpu_custom_call.1} parent=47 // pred_region
          %322 = dma.done [#allocation9], 1024
        $region64: #{tpu_custom_call.1} parent=47 // pred_fallthru
          _
        %s323 = sand.u32 %s34, 1
        %s324 = scalar_lea.sflag [#allocation3], %s323
        %s325 = sand.u32 %s34, 1
        %s326 = smul.addr %s325, 64
        %s327 = scalar_lea.vmem [#allocation2], %s326
        %p328 = pneg %p47
        %p329 = pneg %p44
        %p330 = pneg %p68
        %p331 = pneg %p65
        %p332 = pneg %p89
        %p333 = pneg %p86
        %p334 = pneg %p110
        %p335 = pneg %p107
        %p336 = pneg %p131
        %p337 = pneg %p128
        %p338 = pneg %p152
        %p339 = pneg %p149
        %p340 = pneg %p173
        %p341 = pneg %p170
        %p342 = pneg %p199
        %p343 = pneg %p196
        %s344 = sand.u32 %s186, 1
        %s345 = scalar_lea.sflag [#allocation4], %s344
        %s346 = sand.u32 %s186, 1
        %s347 = smul.addr %s346, 64
        %s348 = scalar_lea.vmem [#allocation10], %s347
        %s349 = smul.u32 8, %s26
        %s350 = smul.u32 8, %s26
        %v351 = vld [vmem:[%s302] sm:$0xff]
        %v352 = vld [vmem:[%s302 + $0x8] sm:$0xff]
        %v353 = vld [vmem:[%s302 + $0x10] sm:$0xff]
        %v354 = vld [vmem:[%s302 + $0x18] sm:$0xff]
        %v355 = vld [vmem:[%s302 + $0x20] sm:$0xff]
        %v356 = vld [vmem:[%s302 + $0x28] sm:$0xff]
        %v357 = vld [vmem:[%s302 + $0x30] sm:$0xff]
        %v358 = vld [vmem:[%s302 + $0x38] sm:$0xff]
        %v359 = vpack.c.bf16 %v352, %v351
        %v360 = vpack.c.bf16 %v354, %v353
        %v361 = vpack.c.bf16 %v356, %v355
        %v362 = vpack.c.bf16 %v358, %v357
        %v363 = vld [vmem:[#allocation5] sm:$0xf]
        %v364 = vld [vmem:[#allocation5 + $0x4] sm:$0xf]
        %v365 = vld [vmem:[#allocation5 + $0x8] sm:$0xf]
        %v366 = vld [vmem:[#allocation5 + $0xc] sm:$0xf]
        %v367 = vld [vmem:[#allocation5 + $0x10] sm:$0xf]
        %v368 = vld [vmem:[#allocation5 + $0x14] sm:$0xf]
        %v369 = vld [vmem:[#allocation5 + $0x18] sm:$0xf]
        %v370 = vld [vmem:[#allocation5 + $0x1c] sm:$0xf]
        %v371 = vld [vmem:[#allocation5 + $0x20] sm:$0xf]
        %v372 = vld [vmem:[#allocation5 + $0x24] sm:$0xf]
        %v373 = vld [vmem:[#allocation5 + $0x28] sm:$0xf]
        %v374 = vld [vmem:[#allocation5 + $0x2c] sm:$0xf]
        %v375 = vld [vmem:[#allocation5 + $0x30] sm:$0xf]
        %v376 = vld [vmem:[#allocation5 + $0x34] sm:$0xf]
        %v377 = vld [vmem:[#allocation5 + $0x38] sm:$0xf]
        %v378 = vld [vmem:[#allocation5 + $0x3c] sm:$0xf]
        %v379 = vld [vmem:[%s2] sm:$0x1]
        %v381 = vperm.slane %v379, 0
        %v399 = vunpack.c.l.b16 %v363
        %v400 = vunpack.c.l.b16 %v364
        %v401 = vunpack.c.l.b16 %v365
        %v402 = vunpack.c.l.b16 %v366
        %v403 = vunpack.c.l.b16 %v367
        %v404 = vunpack.c.l.b16 %v368
        %v405 = vunpack.c.l.b16 %v369
        %v406 = vunpack.c.l.b16 %v370
        %v407 = vunpack.c.l.b16 %v371
        %v408 = vunpack.c.l.b16 %v372
        %v409 = vunpack.c.l.b16 %v373
        %v410 = vunpack.c.l.b16 %v374
        %v411 = vunpack.c.l.b16 %v375
        %v412 = vunpack.c.l.b16 %v376
        %v413 = vunpack.c.l.b16 %v377
        %v414 = vunpack.c.l.b16 %v378
        %v415 = vpack.c.b16 %v400, %v399
        %v416 = vpack.c.b16 %v402, %v401
        %v417 = vpack.c.b16 %v404, %v403
        %v418 = vpack.c.b16 %v406, %v405
        %v419 = vpack.c.b16 %v408, %v407
        %v420 = vpack.c.b16 %v410, %v409
        %v421 = vpack.c.b16 %v412, %v411
        %v422 = vpack.c.b16 %v414, %v413
        %431 = vmatpush.bf16.msra.mxu0 %v422
        %432 = vmatpush.bf16.msra.mxu0 %v421
        %433 = vmatpush.bf16.msra.mxu0 %v420
        %434 = vmatpush.bf16.msra.mxu0 %v419
        %435 = vmatpush.bf16.msra.mxu0 %v418
        %436 = vmatpush.bf16.msra.mxu0 %v417
        %437 = vmatpush.bf16.msra.mxu0 %v416
        %438 = vmatpush.bf16.msra.mxu0 %v415
        %439 = vmatmul.bf16.gmra.mxu0 %v359
        %v440 = vpop.f32.mrf.mxu0
        %v441 = vadd.f32 %v381, %v440
        %v442 = vpop.f32.mrf.mxu0
        %v443 = vadd.f32 %v381, %v442
        %444 = vmatmul.bf16.gmra.mxu0 %v360
        %v445 = vpop.f32.mrf.mxu0
        %v446 = vadd.f32 %v381, %v445
        %v447 = vpop.f32.mrf.mxu0
        %v448 = vadd.f32 %v381, %v447
        %449 = vmatmul.bf16.gmra.mxu0 %v361
        %v450 = vpop.f32.mrf.mxu0
        %v451 = vadd.f32 %v381, %v450
        %v452 = vpop.f32.mrf.mxu0
        %v453 = vadd.f32 %v381, %v452
        %454 = vmatmul.bf16.gmra.mxu0 %v362
        %v455 = vpop.f32.mrf.mxu0
        %v456 = vadd.f32 %v381, %v455
        %v457 = vpop.f32.mrf.mxu0
        %v458 = vadd.f32 %v381, %v457
        %459 = vdwg.mxu0
        %v460 = vmax.f32 %v441, 0.0
        %v461 = vmax.f32 %v443, 0.0
        %v462 = vmax.f32 %v446, 0.0
        %v463 = vmax.f32 %v448, 0.0
        %v464 = vmax.f32 %v451, 0.0
        %v465 = vmax.f32 %v453, 0.0
        %v466 = vmax.f32 %v456, 0.0
        %v467 = vmax.f32 %v458, 0.0
        %v468 = vpack.c.bf16 %v461, %v460
        %v469 = vpack.c.bf16 %v463, %v462
        %v470 = vpack.c.bf16 %v465, %v464
        %v471 = vpack.c.bf16 %v467, %v466
        %v472 = vld [vmem:[#allocation7] sm:$0xf]
        %v473 = vld [vmem:[#allocation7 + $0x4] sm:$0xf]
        %v474 = vld [vmem:[#allocation7 + $0x8] sm:$0xf]
        %v475 = vld [vmem:[#allocation7 + $0xc] sm:$0xf]
        %v476 = vld [vmem:[#allocation7 + $0x10] sm:$0xf]
        %v477 = vld [vmem:[#allocation7 + $0x14] sm:$0xf]
        %v478 = vld [vmem:[#allocation7 + $0x18] sm:$0xf]
        %v479 = vld [vmem:[#allocation7 + $0x1c] sm:$0xf]
        %v480 = vld [vmem:[#allocation7 + $0x20] sm:$0xf]
        %v481 = vld [vmem:[#allocation7 + $0x24] sm:$0xf]
        %v482 = vld [vmem:[#allocation7 + $0x28] sm:$0xf]
        %v483 = vld [vmem:[#allocation7 + $0x2c] sm:$0xf]
        %v484 = vld [vmem:[#allocation7 + $0x30] sm:$0xf]
        %v485 = vld [vmem:[#allocation7 + $0x34] sm:$0xf]
        %v486 = vld [vmem:[#allocation7 + $0x38] sm:$0xf]
        %v487 = vld [vmem:[#allocation7 + $0x3c] sm:$0xf]
        %v488 = vld [vmem:[%s4] sm:$0x1]
        %v490 = vperm.slane %v488, 0
        %v508 = vunpack.c.l.b16 %v472
        %v509 = vunpack.c.l.b16 %v473
        %v510 = vunpack.c.l.b16 %v474
        %v511 = vunpack.c.l.b16 %v475
        %v512 = vunpack.c.l.b16 %v476
        %v513 = vunpack.c.l.b16 %v477
        %v514 = vunpack.c.l.b16 %v478
        %v515 = vunpack.c.l.b16 %v479
        %v516 = vunpack.c.l.b16 %v480
        %v517 = vunpack.c.l.b16 %v481
        %v518 = vunpack.c.l.b16 %v482
        %v519 = vunpack.c.l.b16 %v483
        %v520 = vunpack.c.l.b16 %v484
        %v521 = vunpack.c.l.b16 %v485
        %v522 = vunpack.c.l.b16 %v486
        %v523 = vunpack.c.l.b16 %v487
        %v524 = vpack.c.b16 %v509, %v508
        %v525 = vpack.c.b16 %v511, %v510
        %v526 = vpack.c.b16 %v513, %v512
        %v527 = vpack.c.b16 %v515, %v514
        %v528 = vpack.c.b16 %v517, %v516
        %v529 = vpack.c.b16 %v519, %v518
        %v530 = vpack.c.b16 %v521, %v520
        %v531 = vpack.c.b16 %v523, %v522
        %540 = vmatpush.bf16.msra.mxu0 %v531
        %541 = vmatpush.bf16.msra.mxu0 %v530
        %542 = vmatpush.bf16.msra.mxu0 %v529
        %543 = vmatpush.bf16.msra.mxu0 %v528
        %544 = vmatpush.bf16.msra.mxu0 %v527
        %545 = vmatpush.bf16.msra.mxu0 %v526
        %546 = vmatpush.bf16.msra.mxu0 %v525
        %547 = vmatpush.bf16.msra.mxu0 %v524
        %548 = vmatmul.bf16.gmra.mxu0 %v468
        %v549 = vpop.f32.mrf.mxu0
        %v550 = vadd.f32 %v490, %v549
        %v551 = vpop.f32.mrf.mxu0
        %v552 = vadd.f32 %v490, %v551
        %553 = vmatmul.bf16.gmra.mxu0 %v469
        %v554 = vpop.f32.mrf.mxu0
        %v555 = vadd.f32 %v490, %v554
        %v556 = vpop.f32.mrf.mxu0
        %v557 = vadd.f32 %v490, %v556
        %558 = vmatmul.bf16.gmra.mxu0 %v470
        %v559 = vpop.f32.mrf.mxu0
        %v560 = vadd.f32 %v490, %v559
        %v561 = vpop.f32.mrf.mxu0
        %v562 = vadd.f32 %v490, %v561
        %563 = vmatmul.bf16.gmra.mxu0 %v471
        %v564 = vpop.f32.mrf.mxu0
        %v565 = vadd.f32 %v490, %v564
        %v566 = vpop.f32.mrf.mxu0
        %v567 = vadd.f32 %v490, %v566
        %568 = vdwg.mxu0
        %v569 = vmax.f32 %v550, 0.0
        %v570 = vmax.f32 %v552, 0.0
        %v571 = vmax.f32 %v555, 0.0
        %v572 = vmax.f32 %v557, 0.0
        %v573 = vmax.f32 %v560, 0.0
        %v574 = vmax.f32 %v562, 0.0
        %v575 = vmax.f32 %v565, 0.0
        %v576 = vmax.f32 %v567, 0.0
        %v577 = vpack.c.bf16 %v570, %v569
        %v578 = vpack.c.bf16 %v572, %v571
        %v579 = vpack.c.bf16 %v574, %v573
        %v580 = vpack.c.bf16 %v576, %v575
        %v581 = vld [vmem:[#allocation8] sm:$0xf]
        %v582 = vld [vmem:[#allocation8 + $0x4] sm:$0xf]
        %v583 = vld [vmem:[#allocation8 + $0x8] sm:$0xf]
        %v584 = vld [vmem:[#allocation8 + $0xc] sm:$0xf]
        %v585 = vld [vmem:[#allocation8 + $0x10] sm:$0xf]
        %v586 = vld [vmem:[#allocation8 + $0x14] sm:$0xf]
        %v587 = vld [vmem:[#allocation8 + $0x18] sm:$0xf]
        %v588 = vld [vmem:[#allocation8 + $0x1c] sm:$0xf]
        %v589 = vld [vmem:[#allocation8 + $0x20] sm:$0xf]
        %v590 = vld [vmem:[#allocation8 + $0x24] sm:$0xf]
        %v591 = vld [vmem:[#allocation8 + $0x28] sm:$0xf]
        %v592 = vld [vmem:[#allocation8 + $0x2c] sm:$0xf]
        %v593 = vld [vmem:[#allocation8 + $0x30] sm:$0xf]
        %v594 = vld [vmem:[#allocation8 + $0x34] sm:$0xf]
        %v595 = vld [vmem:[#allocation8 + $0x38] sm:$0xf]
        %v596 = vld [vmem:[#allocation8 + $0x3c] sm:$0xf]
        %v597 = vld [vmem:[%s6] sm:$0x1]
        %v599 = vperm.slane %v597, 0
        %v617 = vunpack.c.l.b16 %v581
        %v618 = vunpack.c.l.b16 %v582
        %v619 = vunpack.c.l.b16 %v583
        %v620 = vunpack.c.l.b16 %v584
        %v621 = vunpack.c.l.b16 %v585
        %v622 = vunpack.c.l.b16 %v586
        %v623 = vunpack.c.l.b16 %v587
        %v624 = vunpack.c.l.b16 %v588
        %v625 = vunpack.c.l.b16 %v589
        %v626 = vunpack.c.l.b16 %v590
        %v627 = vunpack.c.l.b16 %v591
        %v628 = vunpack.c.l.b16 %v592
        %v629 = vunpack.c.l.b16 %v593
        %v630 = vunpack.c.l.b16 %v594
        %v631 = vunpack.c.l.b16 %v595
        %v632 = vunpack.c.l.b16 %v596
        %v633 = vpack.c.b16 %v618, %v617
        %v634 = vpack.c.b16 %v620, %v619
        %v635 = vpack.c.b16 %v622, %v621
        %v636 = vpack.c.b16 %v624, %v623
        %v637 = vpack.c.b16 %v626, %v625
        %v638 = vpack.c.b16 %v628, %v627
        %v639 = vpack.c.b16 %v630, %v629
        %v640 = vpack.c.b16 %v632, %v631
        %649 = vmatpush.bf16.msra.mxu0 %v640
        %650 = vmatpush.bf16.msra.mxu0 %v639
        %651 = vmatpush.bf16.msra.mxu0 %v638
        %652 = vmatpush.bf16.msra.mxu0 %v637
        %653 = vmatpush.bf16.msra.mxu0 %v636
        %654 = vmatpush.bf16.msra.mxu0 %v635
        %655 = vmatpush.bf16.msra.mxu0 %v634
        %656 = vmatpush.bf16.msra.mxu0 %v633
        %657 = vmatmul.bf16.gmra.mxu0 %v577
        %v658 = vpop.f32.mrf.mxu0
        %v659 = vadd.f32 %v599, %v658
        %v660 = vpop.f32.mrf.mxu0
        %v661 = vadd.f32 %v599, %v660
        %662 = vmatmul.bf16.gmra.mxu0 %v578
        %v663 = vpop.f32.mrf.mxu0
        %v664 = vadd.f32 %v599, %v663
        %v665 = vpop.f32.mrf.mxu0
        %v666 = vadd.f32 %v599, %v665
        %667 = vmatmul.bf16.gmra.mxu0 %v579
        %v668 = vpop.f32.mrf.mxu0
        %v669 = vadd.f32 %v599, %v668
        %v670 = vpop.f32.mrf.mxu0
        %v671 = vadd.f32 %v599, %v670
        %672 = vmatmul.bf16.gmra.mxu0 %v580
        %v673 = vpop.f32.mrf.mxu0
        %v674 = vadd.f32 %v599, %v673
        %v675 = vpop.f32.mrf.mxu0
        %v676 = vadd.f32 %v599, %v675
        %677 = vdwg.mxu0
        %v678 = vmul.f32 %v659, %v659
        %v679 = vmul.f32 %v661, %v661
        %v680 = vmul.f32 %v664, %v664
        %v681 = vmul.f32 %v666, %v666
        %v682 = vmul.f32 %v669, %v669
        %v683 = vmul.f32 %v671, %v671
        %v684 = vmul.f32 %v674, %v674
        %v685 = vmul.f32 %v676, %v676
        %686 = vadd.xlane.f32.xlu0 %v678
        %v687 = vpop.xlane.xlu0 %686
        %688 = vadd.xlane.f32.xlu0 %v679
        %v689 = vpop.xlane.xlu0 %688
        %690 = vadd.xlane.f32.xlu0 %v680
        %v691 = vpop.xlane.xlu0 %690
        %692 = vadd.xlane.f32.xlu0 %v681
        %v693 = vpop.xlane.xlu0 %692
        %694 = vadd.xlane.f32.xlu0 %v682
        %v695 = vpop.xlane.xlu0 %694
        %696 = vadd.xlane.f32.xlu0 %v683
        %v697 = vpop.xlane.xlu0 %696
        %698 = vadd.xlane.f32.xlu0 %v684
        %v699 = vpop.xlane.xlu0 %698
        %700 = vadd.xlane.f32.xlu0 %v685
        %v701 = vpop.xlane.xlu0 %700
        %v702 = vmax.f32 %v687, 1e-24
        %v703 = vmax.f32 %v689, 1e-24
        %v704 = vmax.f32 %v691, 1e-24
        %v705 = vmax.f32 %v693, 1e-24
        %v706 = vmax.f32 %v695, 1e-24
        %v707 = vmax.f32 %v697, 1e-24
        %v708 = vmax.f32 %v699, 1e-24
        %v709 = vmax.f32 %v701, 1e-24
        %v710 = vrsqrt.pop %v702
        %v711 = vmul.f32 %v710, %v702
        %v712 = vmul.f32 %v711, %v710
        %v713 = vmul.f32 0.5, %v712
        %v714 = vsub.f32 1.5, %v713
        %v715 = vmul.f32 %v710, %v714
        %vm716 = vweird.f32 %v702
        %vm717 = vweird.f32 %v710
        %vm718 = vmor %vm716, %vm717
        %v719 = vsel %vm718, %v710, %v715
        %v720 = vrsqrt.pop %v703
        %v721 = vmul.f32 %v720, %v703
        %v722 = vmul.f32 %v721, %v720
        %v723 = vmul.f32 0.5, %v722
        %v724 = vsub.f32 1.5, %v723
        %v725 = vmul.f32 %v720, %v724
        %vm726 = vweird.f32 %v703
        %vm727 = vweird.f32 %v720
        %vm728 = vmor %vm726, %vm727
        %v729 = vsel %vm728, %v720, %v725
        %v730 = vrsqrt.pop %v704
        %v731 = vmul.f32 %v730, %v704
        %v732 = vmul.f32 %v731, %v730
        %v733 = vmul.f32 0.5, %v732
        %v734 = vsub.f32 1.5, %v733
        %v735 = vmul.f32 %v730, %v734
        %vm736 = vweird.f32 %v704
        %vm737 = vweird.f32 %v730
        %vm738 = vmor %vm736, %vm737
        %v739 = vsel %vm738, %v730, %v735
        %v740 = vrsqrt.pop %v705
        %v741 = vmul.f32 %v740, %v705
        %v742 = vmul.f32 %v741, %v740
        %v743 = vmul.f32 0.5, %v742
        %v744 = vsub.f32 1.5, %v743
        %v745 = vmul.f32 %v740, %v744
        %vm746 = vweird.f32 %v705
        %vm747 = vweird.f32 %v740
        %vm748 = vmor %vm746, %vm747
        %v749 = vsel %vm748, %v740, %v745
        %v750 = vrsqrt.pop %v706
        %v751 = vmul.f32 %v750, %v706
        %v752 = vmul.f32 %v751, %v750
        %v753 = vmul.f32 0.5, %v752
        %v754 = vsub.f32 1.5, %v753
        %v755 = vmul.f32 %v750, %v754
        %vm756 = vweird.f32 %v706
        %vm757 = vweird.f32 %v750
        %vm758 = vmor %vm756, %vm757
        %v759 = vsel %vm758, %v750, %v755
        %v760 = vrsqrt.pop %v707
        %v761 = vmul.f32 %v760, %v707
        %v762 = vmul.f32 %v761, %v760
        %v763 = vmul.f32 0.5, %v762
        %v764 = vsub.f32 1.5, %v763
        %v765 = vmul.f32 %v760, %v764
        %vm766 = vweird.f32 %v707
        %vm767 = vweird.f32 %v760
        %vm768 = vmor %vm766, %vm767
        %v769 = vsel %vm768, %v760, %v765
        %v770 = vrsqrt.pop %v708
        %v771 = vmul.f32 %v770, %v708
        %v772 = vmul.f32 %v771, %v770
        %v773 = vmul.f32 0.5, %v772
        %v774 = vsub.f32 1.5, %v773
        %v775 = vmul.f32 %v770, %v774
        %vm776 = vweird.f32 %v708
        %vm777 = vweird.f32 %v770
        %vm778 = vmor %vm776, %vm777
        %v779 = vsel %vm778, %v770, %v775
        %v780 = vrsqrt.pop %v709
        %v781 = vmul.f32 %v780, %v709
        %v782 = vmul.f32 %v781, %v780
        %v783 = vmul.f32 0.5, %v782
        %v784 = vsub.f32 1.5, %v783
        %v785 = vmul.f32 %v780, %v784
        %vm786 = vweird.f32 %v709
        %vm787 = vweird.f32 %v780
        %vm788 = vmor %vm786, %vm787
        %v789 = vsel %vm788, %v780, %v785
        %v790 = vmul.f32 %v659, %v719
        %v791 = vmul.f32 %v661, %v729
        %v792 = vmul.f32 %v664, %v739
        %v793 = vmul.f32 %v666, %v749
        %v794 = vmul.f32 %v669, %v759
        %v795 = vmul.f32 %v671, %v769
        %v796 = vmul.f32 %v674, %v779
        %v797 = vmul.f32 %v676, %v789
        %798 = vst [vmem:[%s348] sm:$0xff] %v790
        %799 = vst [vmem:[%s348 + $0x8] sm:$0xff] %v791
        %800 = vst [vmem:[%s348 + $0x10] sm:$0xff] %v792
        %801 = vst [vmem:[%s348 + $0x18] sm:$0xff] %v793
        %802 = vst [vmem:[%s348 + $0x20] sm:$0xff] %v794
        %803 = vst [vmem:[%s348 + $0x28] sm:$0xff] %v795
        %804 = vst [vmem:[%s348 + $0x30] sm:$0xff] %v796
        %805 = vst [vmem:[%s348 + $0x38] sm:$0xff] %v797
        %s806 = sand.u32 %s186, 1
        %s807 = scalar_lea.sflag [#allocation4], %s806
        %s808 = sand.u32 %s186, 1
        %s809 = smul.addr %s808, 64
        %s810 = scalar_lea.vmem [#allocation10], %s809
        // Predicated region
        $region65: #{tpu_custom_call.1} parent=47 // pred_check
          %p811 = pneg %p196
        $region66: #{tpu_custom_call.1} parent=47 // pred_check_branch
          %813 = sbr.rel (%p811) target = $region68
        $region67: #{tpu_custom_call.1} parent=47 // pred_region
          %s814 = smul.u32 8, %s26
          %816 = vsyncadd %s807, 0
          %s817 = smul.addr %s814, 8
          %s818 = scalar_lea.hbm %s7, %s817
          %s819 = sshll.u32 %s810, 4
          %s820 = int_to_ptr.vmem [resolvable:$true] %s819
          %s821 = sshll.u32 %s818, 4
          %s822 = int_to_ptr.hbm [resolvable:$true] %s821
          %827 = dma.vmem_to_hbm [thread:$0]  %s820, 1024, %s822, %s807, 128, 128, 8
        $region68: #{tpu_custom_call.1} parent=47 // pred_fallthru
          _
      $region48: #{tpu_custom_call.1} parent=5 // pred_fallthru
        _
      %p828 = scmp.le.s32.totalorder 2, %s21
      // Predicated region
      $region69: #{tpu_custom_call.1} parent=5 // pred_check
        %p829 = pneg %p828
      $region70: #{tpu_custom_call.1} parent=5 // pred_check_branch
        %831 = sbr.rel (%p829) target = $region72
      $region71: #{tpu_custom_call.1} parent=5 // pred_region
        %s832 = ssub.s32 %s21, 2
        // Predicated region
        $region73: #{tpu_custom_call.1} parent=71 // pred_check
          %p833 = pneg %p202
        $region74: #{tpu_custom_call.1} parent=71 // pred_check_branch
          %835 = sbr.rel (%p833) target = $region76
        $region75: #{tpu_custom_call.1} parent=71 // pred_region
          %s836 = sand.u32 %s187, 1
          %s837 = scalar_lea.sflag [#allocation4], %s836
          %s838 = sand.u32 %s187, 1
          %s839 = smul.addr %s838, 64
          %s840 = scalar_lea.vmem [#allocation10], %s839
          %842 = dma.done %s837, 1024
        $region76: #{tpu_custom_call.1} parent=71 // pred_fallthru
          _
      $region72: #{tpu_custom_call.1} parent=5 // pred_fallthru
        _
    $region6: #{tpu_custom_call.1} parent=1 // loop_footer
      %s25 = sadd.s32 1, %s21
    $region7: #{tpu_custom_call.1} parent=1 // loop_footer_branch
      %20 = sbr.rel target = $region3
    $region8: #{tpu_custom_call.1} parent=1 // loop_exit
      _
    %843 = vsyncpa [#allocation3], 1
    %s844 = scalar_lea.sflag [#allocation3], 1
    %845 = vsyncpa %s844, 1
    %846 = vsyncpa [#allocation6], 1
    %847 = vsyncpa [#allocation9], 1
    %848 = vsyncpa [#allocation4], 1
    %s849 = scalar_lea.sflag [#allocation4], 1
    %850 = vsyncpa %s849, 1

// kernel: tpu_custom_call.1
$region0: #{tpu_custom_call.1}
  #allocation0 [shape = 'u32[]', space=smem, size = 0x4, offset = 0x4, fixed_abs, tag = 'smem constant byte address 0x4 - core index']
  #allocation1 [shape = 'u32[72,128]{1,0:T(1,128)}', space=vmem, size = 0x9000, scoped, tag = 'internal scratch']
  %s0 = inlined_call_operand.hbm [shape: f32[256,128], index: 0, kind: input, shape index: {}]
  %s1 = inlined_call_operand.hbm [shape: bf16[128,128], index: 1, kind: input, shape index: {}]
  %s2 = inlined_call_operand.vmem [shape: f32[1,128], index: 2, kind: input, shape index: {}]
  %s3 = inlined_call_operand.hbm [shape: bf16[128,128], index: 3, kind: input, shape index: {}]
  %s4 = inlined_call_operand.vmem [shape: f32[1,128], index: 4, kind: input, shape index: {}]
  %s5 = inlined_call_operand.hbm [shape: bf16[128,128], index: 5, kind: input, shape index: {}]
  %s6 = inlined_call_operand.vmem [shape: f32[1,128], index: 6, kind: input, shape index: {}]
  %s7 = inlined_call_operand.hbm [shape: f32[256,128], index: 7, kind: output, shape index: {}]
  %s8 = sld [smem:[#allocation0]]
  $region77: #{tpu_custom_call.1} parent=0
    _
  %s10 = ssub.s32 1, %s8
  %s11 = scalar_select 0, %s10, %s8
  $region1: #{tpu_custom_call.1} parent=0
    #allocation2 [shape = 'u8[65536]{0}', space=vmem, size = 0x10000, scoped, tag = 'input window, operand 0']
    #allocation3 [shape = 's32[2]{0}', space=sflag, size = 0x8, scoped, tag = 'scoped memory for tpu_custom_call.1']
    #allocation4 [shape = 's32[2]{0}', space=sflag, size = 0x8, scoped, tag = 'scoped memory for tpu_custom_call.1']
    #allocation5 [shape = 'u8[32768]{0}', space=vmem, size = 0x8000, scoped, tag = 'input window, operand 1, single buffered']
    #allocation6 [shape = 's32[1]{0}', space=sflag, size = 0x4, scoped, tag = 'scoped memory for tpu_custom_call.1']
    #allocation7 [shape = 'u8[32768]{0}', space=vmem, size = 0x8000, scoped, tag = 'input window, operand 3, single buffered']
    #allocation8 [shape = 'u8[32768]{0}', space=vmem, size = 0x8000, scoped, tag = 'input window, operand 5, single buffered']
    #allocation9 [shape = 's32[1]{0}', space=sflag, size = 0x4, scoped, tag = 'scoped memory for tpu_custom_call.1']
    #allocation10 [shape = 'u8[65536]{0}', space=vmem, size = 0x10000, scoped, tag = 'output window, operand 0']
    %12 = vsyncpa [#allocation3], 0
    %s13 = scalar_lea.sflag [#allocation3], 1
    %14 = vsyncpa %s13, 0
    %15 = vsyncpa [#allocation6], 0
    %16 = vsyncpa [#allocation9], 0
    %17 = vsyncpa [#allocation4], 0
    %s18 = scalar_lea.sflag [#allocation4], 1
    %19 = vsyncpa %s18, 0
    loop: start=0, step=1, limit=6
    $region2: #{tpu_custom_call.1} parent=1 // loop_pre_header
      _
    $region3: #{tpu_custom_call.1} parent=1 // loop_header
      %s21 = sphi 0, %s25
      %p22 = scmp.ge.s32.totalorder %s21, 6
      %s31 = sphi 0, %s33
      %s34 = sphi 0, %s31
      %s35 = sphi 0, %s34
      %s51 = sphi 0, %s35
      %s55 = sphi 0, %s55
      %s57 = sphi 0, %s55
      %s58 = sphi 0, %s57
      %s72 = sphi 0, %s58
      %s76 = sphi 0, %s76
      %s78 = sphi 0, %s76
      %s79 = sphi 0, %s78
      %s93 = sphi 0, %s79
      %s97 = sphi 0, %s97
      %s99 = sphi 0, %s97
      %s100 = sphi 0, %s99
      %s114 = sphi 0, %s100
      %s118 = sphi 0, %s118
      %s120 = sphi 0, %s118
      %s121 = sphi 0, %s120
      %s135 = sphi 0, %s121
      %s139 = sphi 0, %s139
      %s141 = sphi 0, %s139
      %s142 = sphi 0, %s141
      %s156 = sphi 0, %s142
      %s160 = sphi 0, %s160
      %s162 = sphi 0, %s160
      %s163 = sphi 0, %s162
      %s177 = sphi 0, %s163
      %s183 = sphi 0, %s185
      %s186 = sphi 0, %s183
      %s187 = sphi 0, %s186
      %s203 = sphi 0, %s187
    $region4: #{tpu_custom_call.1} parent=1 // loop_header_branch
      %24 = sbr.rel (%p22) target = $region8
    $region5: #{tpu_custom_call.1} parent=1 // loop_body
      %s26 = ssub.s32 %s21, 1
      %s27 = ssub.s32 %s21, 2
      %s28 = sadd.s32 %s21, 1
      %s29 = ssub.s32 %s21, %s28
      %p30 = scmp.eq.s32.totalorder %s29, 0
      %s32 = sadd.s32 %s31, 1
      %s33 = scalar_select %p30, %s31, %s32
      %p36 = pneg %p30
      %p37 = scmp.eq.s32.totalorder %s21, 3
      %p38 = por %p36, %p37
      %p39 = scmp.ne.s32.totalorder %s31, %s34
      %p40 = scmp.eq.s32.totalorder %s21, 0
      %p41 = por %p39, %p40
      %p42 = scmp.ne.s32.totalorder %s31, %s34
      %p43 = scmp.eq.s32.totalorder %s26, 3
      %p44 = por %p42, %p43
      %p45 = scmp.ne.s32.totalorder %s34, %s35
      %p46 = scmp.eq.s32.totalorder %s26, 0
      %p47 = por %p45, %p46
      %p48 = scmp.ne.s32.totalorder %s34, %s35
      %p49 = scmp.eq.s32.totalorder %s27, 3
      %p50 = por %p48, %p49
      %p52 = scmp.ne.s32.totalorder %s35, %s51
      %p53 = scmp.eq.s32.totalorder %s27, 0
      %p54 = por %p52, %p53
      %s56 = sadd.s32 %s55, 1
      %p59 = scmp.eq.s32.totalorder %s21, 3
      %p60 = scmp.ne.s32.totalorder %s55, %s57
      %p61 = scmp.eq.s32.totalorder %s21, 0
      %p62 = por %p60, %p61
      %p63 = scmp.ne.s32.totalorder %s55, %s57
      %p64 = scmp.eq.s32.totalorder %s26, 3
      %p65 = por %p63, %p64
      %p66 = scmp.ne.s32.totalorder %s57, %s58
      %p67 = scmp.eq.s32.totalorder %s26, 0
      %p68 = por %p66, %p67
      %p69 = scmp.ne.s32.totalorder %s57, %s58
      %p70 = scmp.eq.s32.totalorder %s27, 3
      %p71 = por %p69, %p70
      %p73 = scmp.ne.s32.totalorder %s58, %s72
      %p74 = scmp.eq.s32.totalorder %s27, 0
      %p75 = por %p73, %p74
      %s77 = sadd.s32 %s76, 1
      %p80 = scmp.eq.s32.totalorder %s21, 3
      %p81 = scmp.ne.s32.totalorder %s76, %s78
      %p82 = scmp.eq.s32.totalorder %s21, 0
      %p83 = por %p81, %p82
      %p84 = scmp.ne.s32.totalorder %s76, %s78
      %p85 = scmp.eq.s32.totalorder %s26, 3
      %p86 = por %p84, %p85
      %p87 = scmp.ne.s32.totalorder %s78, %s79
      %p88 = scmp.eq.s32.totalorder %s26, 0
      %p89 = por %p87, %p88
      %p90 = scmp.ne.s32.totalorder %s78, %s79
      %p91 = scmp.eq.s32.totalorder %s27, 3
      %p92 = por %p90, %p91
      %p94 = scmp.ne.s32.totalorder %s79, %s93
      %p95 = scmp.eq.s32.totalorder %s27, 0
      %p96 = por %p94, %p95
      %s98 = sadd.s32 %s97, 1
      %p101 = scmp.eq.s32.totalorder %s21, 3
      %p102 = scmp.ne.s32.totalorder %s97, %s99
      %p103 = scmp.eq.s32.totalorder %s21, 0
      %p104 = por %p102, %p103
      %p105 = scmp.ne.s32.totalorder %s97, %s99
      %p106 = scmp.eq.s32.totalorder %s26, 3
      %p107 = por %p105, %p106
      %p108 = scmp.ne.s32.totalorder %s99, %s100
      %p109 = scmp.eq.s32.totalorder %s26, 0
      %p110 = por %p108, %p109
      %p111 = scmp.ne.s32.totalorder %s99, %s100
      %p112 = scmp.eq.s32.totalorder %s27, 3
      %p113 = por %p111, %p112
      %p115 = scmp.ne.s32.totalorder %s100, %s114
      %p116 = scmp.eq.s32.totalorder %s27, 0
      %p117 = por %p115, %p116
      %s119 = sadd.s32 %s118, 1
      %p122 = scmp.eq.s32.totalorder %s21, 3
      %p123 = scmp.ne.s32.totalorder %s118, %s120
      %p124 = scmp.eq.s32.totalorder %s21, 0
      %p125 = por %p123, %p124
      %p126 = scmp.ne.s32.totalorder %s118, %s120
      %p127 = scmp.eq.s32.totalorder %s26, 3
      %p128 = por %p126, %p127
      %p129 = scmp.ne.s32.totalorder %s120, %s121
      %p130 = scmp.eq.s32.totalorder %s26, 0
      %p131 = por %p129, %p130
      %p132 = scmp.ne.s32.totalorder %s120, %s121
      %p133 = scmp.eq.s32.totalorder %s27, 3
      %p134 = por %p132, %p133
      %p136 = scmp.ne.s32.totalorder %s121, %s135
      %p137 = scmp.eq.s32.totalorder %s27, 0
      %p138 = por %p136, %p137
      %s140 = sadd.s32 %s139, 1
      %p143 = scmp.eq.s32.totalorder %s21, 3
      %p144 = scmp.ne.s32.totalorder %s139, %s141
      %p145 = scmp.eq.s32.totalorder %s21, 0
      %p146 = por %p144, %p145
      %p147 = scmp.ne.s32.totalorder %s139, %s141
      %p148 = scmp.eq.s32.totalorder %s26, 3
      %p149 = por %p147, %p148
      %p150 = scmp.ne.s32.totalorder %s141, %s142
      %p151 = scmp.eq.s32.totalorder %s26, 0
      %p152 = por %p150, %p151
      %p153 = scmp.ne.s32.totalorder %s141, %s142
      %p154 = scmp.eq.s32.totalorder %s27, 3
      %p155 = por %p153, %p154
      %p157 = scmp.ne.s32.totalorder %s142, %s156
      %p158 = scmp.eq.s32.totalorder %s27, 0
      %p159 = por %p157, %p158
      %s161 = sadd.s32 %s160, 1
      %p164 = scmp.eq.s32.totalorder %s21, 3
      %p165 = scmp.ne.s32.totalorder %s160, %s162
      %p166 = scmp.eq.s32.totalorder %s21, 0
      %p167 = por %p165, %p166
      %p168 = scmp.ne.s32.totalorder %s160, %s162
      %p169 = scmp.eq.s32.totalorder %s26, 3
      %p170 = por %p168, %p169
      %p171 = scmp.ne.s32.totalorder %s162, %s163
      %p172 = scmp.eq.s32.totalorder %s26, 0
      %p173 = por %p171, %p172
      %p174 = scmp.ne.s32.totalorder %s162, %s163
      %p175 = scmp.eq.s32.totalorder %s27, 3
      %p176 = por %p174, %p175
      %p178 = scmp.ne.s32.totalorder %s163, %s177
      %p179 = scmp.eq.s32.totalorder %s27, 0
      %p180 = por %p178, %p179
      %s181 = ssub.s32 %s21, %s28
      %p182 = scmp.eq.s32.totalorder %s181, 0
      %s184 = sadd.s32 %s183, 1
      %s185 = scalar_select %p182, %s183, %s184
      %p188 = pneg %p182
      %p189 = scmp.eq.s32.totalorder %s21, 3
      %p190 = por %p188, %p189
      %p191 = scmp.ne.s32.totalorder %s183, %s186
      %p192 = scmp.eq.s32.totalorder %s21, 0
      %p193 = por %p191, %p192
      %p194 = scmp.ne.s32.totalorder %s183, %s186
      %p195 = scmp.eq.s32.totalorder %s26, 3
      %p196 = por %p194, %p195
      %p197 = scmp.ne.s32.totalorder %s186, %s187
      %p198 = scmp.eq.s32.totalorder %s26, 0
      %p199 = por %p197, %p198
      %p200 = scmp.ne.s32.totalorder %s186, %s187
      %p201 = scmp.eq.s32.totalorder %s27, 3
      %p202 = por %p200, %p201
      %p204 = scmp.ne.s32.totalorder %s187, %s203
      %p205 = scmp.eq.s32.totalorder %s27, 0
      %p206 = por %p204, %p205
      %p207 = scmp.le.s32.totalorder 1, %s21
      %p208 = scmp.lt.s32.totalorder %s21, 5
      %p209 = pnand %p207, %p208
      %p210 = pneg %p209
      // Predicated region
      $region9: #{tpu_custom_call.1} parent=5 // pred_check
        _
      $region10: #{tpu_custom_call.1} parent=5 // pred_check_branch
        %212 = sbr.rel (%p209) target = $region12
      $region11: #{tpu_custom_call.1} parent=5 // pred_region
        %s213 = ssub.s32 %s21, 1
        // Predicated region
        $region13: #{tpu_custom_call.1} parent=11 // pred_check
          %p214 = pneg %p68
        $region14: #{tpu_custom_call.1} parent=11 // pred_check_branch
          %216 = sbr.rel (%p214) target = $region16
        $region15: #{tpu_custom_call.1} parent=11 // pred_region
          %218 = vsyncadd [#allocation6], 0
          %s219 = sshll.u32 %s1, 4
          %s220 = int_to_ptr.hbm [resolvable:$true] %s219
          %s221 = sshll.u32 [#allocation5], 4
          %s222 = int_to_ptr.vmem [resolvable:$true] %s221
          %227 = dma.hbm_to_vmem [thread:$0]  %s220, 1024, %s222, [#allocation6], 64, 64, 4
        $region16: #{tpu_custom_call.1} parent=11 // pred_fallthru
          _
        // Predicated region
        $region17: #{tpu_custom_call.1} parent=11 // pred_check
          %p228 = pneg %p89
        $region18: #{tpu_custom_call.1} parent=11 // pred_check_branch
          %230 = sbr.rel (%p228) target = $region20
        $region19: #{tpu_custom_call.1} parent=11 // pred_region
          _
        $region20: #{tpu_custom_call.1} parent=11 // pred_fallthru
          _
        // Predicated region
        $region21: #{tpu_custom_call.1} parent=11 // pred_check
          %p231 = pneg %p110
        $region22: #{tpu_custom_call.1} parent=11 // pred_check_branch
          %233 = sbr.rel (%p231) target = $region24
        $region23: #{tpu_custom_call.1} parent=11 // pred_region
          %235 = vsyncadd [#allocation6], 0
          %s236 = sshll.u32 %s3, 4
          %s237 = int_to_ptr.hbm [resolvable:$true] %s236
          %s238 = sshll.u32 [#allocation7], 4
          %s239 = int_to_ptr.vmem [resolvable:$true] %s238
          %244 = dma.hbm_to_vmem [thread:$0]  %s237, 1024, %s239, [#allocation6], 64, 64, 4
        $region24: #{tpu_custom_call.1} parent=11 // pred_fallthru
          _
        // Predicated region
        $region25: #{tpu_custom_call.1} parent=11 // pred_check
          %p245 = pneg %p131
        $region26: #{tpu_custom_call.1} parent=11 // pred_check_branch
          %247 = sbr.rel (%p245) target = $region28
        $region27: #{tpu_custom_call.1} parent=11 // pred_region
          _
        $region28: #{tpu_custom_call.1} parent=11 // pred_fallthru
          _
        // Predicated region
        $region29: #{tpu_custom_call.1} parent=11 // pred_check
          %p248 = pneg %p152
        $region30: #{tpu_custom_call.1} parent=11 // pred_check_branch
          %250 = sbr.rel (%p248) target = $region32
        $region31: #{tpu_custom_call.1} parent=11 // pred_region
          %252 = vsyncadd [#allocation9], 0
          %s253 = sshll.u32 %s5, 4
          %s254 = int_to_ptr.hbm [resolvable:$true] %s253
          %s255 = sshll.u32 [#allocation8], 4
          %s256 = int_to_ptr.vmem [resolvable:$true] %s255
          %261 = dma.hbm_to_vmem [thread:$0]  %s254, 1024, %s256, [#allocation9], 64, 64, 4
        $region32: #{tpu_custom_call.1} parent=11 // pred_fallthru
          _
        // Predicated region
        $region33: #{tpu_custom_call.1} parent=11 // pred_check
          %p262 = pneg %p173
        $region34: #{tpu_custom_call.1} parent=11 // pred_check_branch
          %264 = sbr.rel (%p262) target = $region36
        $region35: #{tpu_custom_call.1} parent=11 // pred_region
          _
        $region36: #{tpu_custom_call.1} parent=11 // pred_fallthru
          _
      $region12: #{tpu_custom_call.1} parent=5 // pred_fallthru
        _
      %p265 = scmp.lt.s32.totalorder %s21, 4
      // Predicated region
      $region37: #{tpu_custom_call.1} parent=5 // pred_check
        %p266 = pneg %p265
      $region38: #{tpu_custom_call.1} parent=5 // pred_check_branch
        %268 = sbr.rel (%p266) target = $region40
      $region39: #{tpu_custom_call.1} parent=5 // pred_region
        // Predicated region
        $region41: #{tpu_custom_call.1} parent=39 // pred_check
          %p269 = pneg %p41
        $region42: #{tpu_custom_call.1} parent=39 // pred_check_branch
          %271 = sbr.rel (%p269) target = $region44
        $region43: #{tpu_custom_call.1} parent=39 // pred_region
          %s272 = sand.u32 %s31, 1
          %s273 = scalar_lea.sflag [#allocation3], %s272
          %s274 = sand.u32 %s31, 1
          %s275 = smul.addr %s274, 64
          %s276 = scalar_lea.vmem [#allocation2], %s275
          %s277 = smul.u32 8, %s21
          %279 = vsyncadd %s273, 0
          %s280 = smul.addr %s277, 8
          %s281 = scalar_lea.hbm %s0, %s280
          %s282 = sshll.u32 %s281, 4
          %s283 = int_to_ptr.hbm [resolvable:$true] %s282
          %s284 = sshll.u32 %s276, 4
          %s285 = int_to_ptr.vmem [resolvable:$true] %s284
          %290 = dma.hbm_to_vmem [thread:$0]  %s283, 1024, %s285, %s273, 128, 128, 8
        $region44: #{tpu_custom_call.1} parent=39 // pred_fallthru
          _
      $region40: #{tpu_custom_call.1} parent=5 // pred_fallthru
        _
      %p291 = scmp.le.s32.totalorder 1, %s21
      %p292 = scmp.lt.s32.totalorder %s21, 5
      %p293 = pnand %p291, %p292
      %p294 = pneg %p293
      // Predicated region
      $region45: #{tpu_custom_call.1} parent=5 // pred_check
        _
      $region46: #{tpu_custom_call.1} parent=5 // pred_check_branch
        %296 = sbr.rel (%p293) target = $region48
      $region47: #{tpu_custom_call.1} parent=5 // pred_region
        %s297 = ssub.s32 %s21, 1
        %s298 = sand.u32 %s34, 1
        %s299 = scalar_lea.sflag [#allocation3], %s298
        %s300 = sand.u32 %s34, 1
        %s301 = smul.addr %s300, 64
        %s302 = scalar_lea.vmem [#allocation2], %s301
        // Predicated region
        $region49: #{tpu_custom_call.1} parent=47 // pred_check
          %p303 = pneg %p47
        $region50: #{tpu_custom_call.1} parent=47 // pred_check_branch
          %305 = sbr.rel (%p303) target = $region52
        $region51: #{tpu_custom_call.1} parent=47 // pred_region
          %307 = dma.done %s299, 1024
        $region52: #{tpu_custom_call.1} parent=47 // pred_fallthru
          _
        // Predicated region
        $region53: #{tpu_custom_call.1} parent=47 // pred_check
          %p308 = pneg %p68
        $region54: #{tpu_custom_call.1} parent=47 // pred_check_branch
          %310 = sbr.rel (%p308) target = $region56
        $region55: #{tpu_custom_call.1} parent=47 // pred_region
          %312 = dma.done [#allocation6], 1024
        $region56: #{tpu_custom_call.1} parent=47 // pred_fallthru
          _
        // Predicated region
        $region57: #{tpu_custom_call.1} parent=47 // pred_check
          %p313 = pneg %p110
        $region58: #{tpu_custom_call.1} parent=47 // pred_check_branch
          %315 = sbr.rel (%p313) target = $region60
        $region59: #{tpu_custom_call.1} parent=47 // pred_region
          %317 = dma.done [#allocation6], 1024
        $region60: #{tpu_custom_call.1} parent=47 // pred_fallthru
          _
        // Predicated region
        $region61: #{tpu_custom_call.1} parent=47 // pred_check
          %p318 = pneg %p152
        $region62: #{tpu_custom_call.1} parent=47 // pred_check_branch
          %320 = sbr.rel (%p318) target = $region64
        $region63: #{tpu_custom_call.1} parent=47 // pred_region
          %322 = dma.done [#allocation9], 1024
        $region64: #{tpu_custom_call.1} parent=47 // pred_fallthru
          _
        %s323 = sand.u32 %s34, 1
        %s324 = scalar_lea.sflag [#allocation3], %s323
        %s325 = sand.u32 %s34, 1
        %s326 = smul.addr %s325, 64
        %s327 = scalar_lea.vmem [#allocation2], %s326
        %p328 = pneg %p47
        %p329 = pneg %p44
        %p330 = pneg %p68
        %p331 = pneg %p65
        %p332 = pneg %p89
        %p333 = pneg %p86
        %p334 = pneg %p110
        %p335 = pneg %p107
        %p336 = pneg %p131
        %p337 = pneg %p128
        %p338 = pneg %p152
        %p339 = pneg %p149
        %p340 = pneg %p173
        %p341 = pneg %p170
        %p342 = pneg %p199
        %p343 = pneg %p196
        %s344 = sand.u32 %s186, 1
        %s345 = scalar_lea.sflag [#allocation4], %s344
        %s346 = sand.u32 %s186, 1
        %s347 = smul.addr %s346, 64
        %s348 = scalar_lea.vmem [#allocation10], %s347
        %s349 = smul.u32 8, %s26
        %s350 = smul.u32 8, %s26
        %v351 = vld [vmem:[%s302] sm:$0xff]
        %v352 = vld [vmem:[%s302 + $0x8] sm:$0xff]
        %v353 = vld [vmem:[%s302 + $0x10] sm:$0xff]
        %v354 = vld [vmem:[%s302 + $0x18] sm:$0xff]
        %v355 = vld [vmem:[%s302 + $0x20] sm:$0xff]
        %v356 = vld [vmem:[%s302 + $0x28] sm:$0xff]
        %v357 = vld [vmem:[%s302 + $0x30] sm:$0xff]
        %v358 = vld [vmem:[%s302 + $0x38] sm:$0xff]
        %v359 = vpack.c.bf16 %v352, %v351
        %v360 = vpack.c.bf16 %v354, %v353
        %v361 = vpack.c.bf16 %v356, %v355
        %v362 = vpack.c.bf16 %v358, %v357
        %v363 = vld [vmem:[#allocation5] sm:$0xf]
        %v364 = vld [vmem:[#allocation5 + $0x4] sm:$0xf]
        %v365 = vld [vmem:[#allocation5 + $0x8] sm:$0xf]
        %v366 = vld [vmem:[#allocation5 + $0xc] sm:$0xf]
        %v367 = vld [vmem:[#allocation5 + $0x10] sm:$0xf]
        %v368 = vld [vmem:[#allocation5 + $0x14] sm:$0xf]
        %v369 = vld [vmem:[#allocation5 + $0x18] sm:$0xf]
        %v370 = vld [vmem:[#allocation5 + $0x1c] sm:$0xf]
        %v371 = vld [vmem:[#allocation5 + $0x20] sm:$0xf]
        %v372 = vld [vmem:[#allocation5 + $0x24] sm:$0xf]
        %v373 = vld [vmem:[#allocation5 + $0x28] sm:$0xf]
        %v374 = vld [vmem:[#allocation5 + $0x2c] sm:$0xf]
        %v375 = vld [vmem:[#allocation5 + $0x30] sm:$0xf]
        %v376 = vld [vmem:[#allocation5 + $0x34] sm:$0xf]
        %v377 = vld [vmem:[#allocation5 + $0x38] sm:$0xf]
        %v378 = vld [vmem:[#allocation5 + $0x3c] sm:$0xf]
        %v379 = vld [vmem:[%s2] sm:$0x1]
        %v381 = vperm.slane %v379, 0
        %v399 = vunpack.c.l.b16 %v363
        %v400 = vunpack.c.l.b16 %v364
        %v401 = vunpack.c.l.b16 %v365
        %v402 = vunpack.c.l.b16 %v366
        %v403 = vunpack.c.l.b16 %v367
        %v404 = vunpack.c.l.b16 %v368
        %v405 = vunpack.c.l.b16 %v369
        %v406 = vunpack.c.l.b16 %v370
        %v407 = vunpack.c.l.b16 %v371
        %v408 = vunpack.c.l.b16 %v372
        %v409 = vunpack.c.l.b16 %v373
        %v410 = vunpack.c.l.b16 %v374
        %v411 = vunpack.c.l.b16 %v375
        %v412 = vunpack.c.l.b16 %v376
        %v413 = vunpack.c.l.b16 %v377
        %v414 = vunpack.c.l.b16 %v378
        %v415 = vpack.c.b16 %v400, %v399
        %v416 = vpack.c.b16 %v402, %v401
        %v417 = vpack.c.b16 %v404, %v403
        %v418 = vpack.c.b16 %v406, %v405
        %v419 = vpack.c.b16 %v408, %v407
        %v420 = vpack.c.b16 %v410, %v409
        %v421 = vpack.c.b16 %v412, %v411
        %v422 = vpack.c.b16 %v414, %v413
        %431 = vmatpush.bf16.msra.mxu0 %v422
        %432 = vmatpush.bf16.msra.mxu0 %v421
        %433 = vmatpush.bf16.msra.mxu0 %v420
        %434 = vmatpush.bf16.msra.mxu0 %v419
        %435 = vmatpush.bf16.msra.mxu0 %v418
        %436 = vmatpush.bf16.msra.mxu0 %v417
        %437 = vmatpush.bf16.msra.mxu0 %v416
        %438 = vmatpush.bf16.msra.mxu0 %v415
        %439 = vmatmul.bf16.gmra.mxu0 %v359
        %v440 = vpop.f32.mrf.mxu0
        %v441 = vadd.f32 %v381, %v440
        %v442 = vpop.f32.mrf.mxu0
        %v443 = vadd.f32 %v381, %v442
        %444 = vmatmul.bf16.gmra.mxu0 %v360
        %v445 = vpop.f32.mrf.mxu0
        %v446 = vadd.f32 %v381, %v445
        %v447 = vpop.f32.mrf.mxu0
        %v448 = vadd.f32 %v381, %v447
        %449 = vmatmul.bf16.gmra.mxu0 %v361
        %v450 = vpop.f32.mrf.mxu0
        %v451 = vadd.f32 %v381, %v450
        %v452 = vpop.f32.mrf.mxu0
        %v453 = vadd.f32 %v381, %v452
        %454 = vmatmul.bf16.gmra.mxu0 %v362
        %v455 = vpop.f32.mrf.mxu0
        %v456 = vadd.f32 %v381, %v455
        %v457 = vpop.f32.mrf.mxu0
        %v458 = vadd.f32 %v381, %v457
        %459 = vdwg.mxu0
        %v460 = vmax.f32 %v441, 0.0
        %v461 = vmax.f32 %v443, 0.0
        %v462 = vmax.f32 %v446, 0.0
        %v463 = vmax.f32 %v448, 0.0
        %v464 = vmax.f32 %v451, 0.0
        %v465 = vmax.f32 %v453, 0.0
        %v466 = vmax.f32 %v456, 0.0
        %v467 = vmax.f32 %v458, 0.0
        %v468 = vpack.c.bf16 %v461, %v460
        %v469 = vpack.c.bf16 %v463, %v462
        %v470 = vpack.c.bf16 %v465, %v464
        %v471 = vpack.c.bf16 %v467, %v466
        %v472 = vld [vmem:[#allocation7] sm:$0xf]
        %v473 = vld [vmem:[#allocation7 + $0x4] sm:$0xf]
        %v474 = vld [vmem:[#allocation7 + $0x8] sm:$0xf]
        %v475 = vld [vmem:[#allocation7 + $0xc] sm:$0xf]
        %v476 = vld [vmem:[#allocation7 + $0x10] sm:$0xf]
        %v477 = vld [vmem:[#allocation7 + $0x14] sm:$0xf]
        %v478 = vld [vmem:[#allocation7 + $0x18] sm:$0xf]
        %v479 = vld [vmem:[#allocation7 + $0x1c] sm:$0xf]
        %v480 = vld [vmem:[#allocation7 + $0x20] sm:$0xf]
        %v481 = vld [vmem:[#allocation7 + $0x24] sm:$0xf]
        %v482 = vld [vmem:[#allocation7 + $0x28] sm:$0xf]
        %v483 = vld [vmem:[#allocation7 + $0x2c] sm:$0xf]
        %v484 = vld [vmem:[#allocation7 + $0x30] sm:$0xf]
        %v485 = vld [vmem:[#allocation7 + $0x34] sm:$0xf]
        %v486 = vld [vmem:[#allocation7 + $0x38] sm:$0xf]
        %v487 = vld [vmem:[#allocation7 + $0x3c] sm:$0xf]
        %v488 = vld [vmem:[%s4] sm:$0x1]
        %v490 = vperm.slane %v488, 0
        %v508 = vunpack.c.l.b16 %v472
        %v509 = vunpack.c.l.b16 %v473
        %v510 = vunpack.c.l.b16 %v474
        %v511 = vunpack.c.l.b16 %v475
        %v512 = vunpack.c.l.b16 %v476
        %v513 = vunpack.c.l.b16 %v477
        %v514 = vunpack.c.l.b16 %v478
        %v515 = vunpack.c.l.b16 %v479
        %v516 = vunpack.c.l.b16 %v480
        %v517 = vunpack.c.l.b16 %v481
        %v518 = vunpack.c.l.b16 %v482
        %v519 = vunpack.c.l.b16 %v483
        %v520 = vunpack.c.l.b16 %v484
        %v521 = vunpack.c.l.b16 %v485
        %v522 = vunpack.c.l.b16 %v486
        %v523 = vunpack.c.l.b16 %v487
        %v524 = vpack.c.b16 %v509, %v508
        %v525 = vpack.c.b16 %v511, %v510
        %v526 = vpack.c.b16 %v513, %v512
        %v527 = vpack.c.b16 %v515, %v514
        %v528 = vpack.c.b16 %v517, %v516
        %v529 = vpack.c.b16 %v519, %v518
        %v530 = vpack.c.b16 %v521, %v520
        %v531 = vpack.c.b16 %v523, %v522
        %540 = vmatpush.bf16.msra.mxu0 %v531
        %541 = vmatpush.bf16.msra.mxu0 %v530
        %542 = vmatpush.bf16.msra.mxu0 %v529
        %543 = vmatpush.bf16.msra.mxu0 %v528
        %544 = vmatpush.bf16.msra.mxu0 %v527
        %545 = vmatpush.bf16.msra.mxu0 %v526
        %546 = vmatpush.bf16.msra.mxu0 %v525
        %547 = vmatpush.bf16.msra.mxu0 %v524
        %548 = vmatmul.bf16.gmra.mxu0 %v468
        %v549 = vpop.f32.mrf.mxu0
        %v550 = vadd.f32 %v490, %v549
        %v551 = vpop.f32.mrf.mxu0
        %v552 = vadd.f32 %v490, %v551
        %553 = vmatmul.bf16.gmra.mxu0 %v469
        %v554 = vpop.f32.mrf.mxu0
        %v555 = vadd.f32 %v490, %v554
        %v556 = vpop.f32.mrf.mxu0
        %v557 = vadd.f32 %v490, %v556
        %558 = vmatmul.bf16.gmra.mxu0 %v470
        %v559 = vpop.f32.mrf.mxu0
        %v560 = vadd.f32 %v490, %v559
        %v561 = vpop.f32.mrf.mxu0
        %v562 = vadd.f32 %v490, %v561
        %563 = vmatmul.bf16.gmra.mxu0 %v471
        %v564 = vpop.f32.mrf.mxu0
        %v565 = vadd.f32 %v490, %v564
        %v566 = vpop.f32.mrf.mxu0
        %v567 = vadd.f32 %v490, %v566
        %568 = vdwg.mxu0
        %v569 = vmax.f32 %v550, 0.0
        %v570 = vmax.f32 %v552, 0.0
        %v571 = vmax.f32 %v555, 0.0
        %v572 = vmax.f32 %v557, 0.0
        %v573 = vmax.f32 %v560, 0.0
        %v574 = vmax.f32 %v562, 0.0
        %v575 = vmax.f32 %v565, 0.0
        %v576 = vmax.f32 %v567, 0.0
        %v577 = vpack.c.bf16 %v570, %v569
        %v578 = vpack.c.bf16 %v572, %v571
        %v579 = vpack.c.bf16 %v574, %v573
        %v580 = vpack.c.bf16 %v576, %v575
        %v581 = vld [vmem:[#allocation8] sm:$0xf]
        %v582 = vld [vmem:[#allocation8 + $0x4] sm:$0xf]
        %v583 = vld [vmem:[#allocation8 + $0x8] sm:$0xf]
        %v584 = vld [vmem:[#allocation8 + $0xc] sm:$0xf]
        %v585 = vld [vmem:[#allocation8 + $0x10] sm:$0xf]
        %v586 = vld [vmem:[#allocation8 + $0x14] sm:$0xf]
        %v587 = vld [vmem:[#allocation8 + $0x18] sm:$0xf]
        %v588 = vld [vmem:[#allocation8 + $0x1c] sm:$0xf]
        %v589 = vld [vmem:[#allocation8 + $0x20] sm:$0xf]
        %v590 = vld [vmem:[#allocation8 + $0x24] sm:$0xf]
        %v591 = vld [vmem:[#allocation8 + $0x28] sm:$0xf]
        %v592 = vld [vmem:[#allocation8 + $0x2c] sm:$0xf]
        %v593 = vld [vmem:[#allocation8 + $0x30] sm:$0xf]
        %v594 = vld [vmem:[#allocation8 + $0x34] sm:$0xf]
        %v595 = vld [vmem:[#allocation8 + $0x38] sm:$0xf]
        %v596 = vld [vmem:[#allocation8 + $0x3c] sm:$0xf]
        %v597 = vld [vmem:[%s6] sm:$0x1]
        %v599 = vperm.slane %v597, 0
        %v617 = vunpack.c.l.b16 %v581
        %v618 = vunpack.c.l.b16 %v582
        %v619 = vunpack.c.l.b16 %v583
        %v620 = vunpack.c.l.b16 %v584
        %v621 = vunpack.c.l.b16 %v585
        %v622 = vunpack.c.l.b16 %v586
        %v623 = vunpack.c.l.b16 %v587
        %v624 = vunpack.c.l.b16 %v588
        %v625 = vunpack.c.l.b16 %v589
        %v626 = vunpack.c.l.b16 %v590
        %v627 = vunpack.c.l.b16 %v591
        %v628 = vunpack.c.l.b16 %v592
        %v629 = vunpack.c.l.b16 %v593
        %v630 = vunpack.c.l.b16 %v594
        %v631 = vunpack.c.l.b16 %v595
        %v632 = vunpack.c.l.b16 %v596
        %v633 = vpack.c.b16 %v618, %v617
        %v634 = vpack.c.b16 %v620, %v619
        %v635 = vpack.c.b16 %v622, %v621
        %v636 = vpack.c.b16 %v624, %v623
        %v637 = vpack.c.b16 %v626, %v625
        %v638 = vpack.c.b16 %v628, %v627
        %v639 = vpack.c.b16 %v630, %v629
        %v640 = vpack.c.b16 %v632, %v631
        %649 = vmatpush.bf16.msra.mxu0 %v640
        %650 = vmatpush.bf16.msra.mxu0 %v639
        %651 = vmatpush.bf16.msra.mxu0 %v638
        %652 = vmatpush.bf16.msra.mxu0 %v637
        %653 = vmatpush.bf16.msra.mxu0 %v636
        %654 = vmatpush.bf16.msra.mxu0 %v635
        %655 = vmatpush.bf16.msra.mxu0 %v634
        %656 = vmatpush.bf16.msra.mxu0 %v633
        %657 = vmatmul.bf16.gmra.mxu0 %v577
        %v658 = vpop.f32.mrf.mxu0
        %v659 = vadd.f32 %v599, %v658
        %v660 = vpop.f32.mrf.mxu0
        %v661 = vadd.f32 %v599, %v660
        %662 = vmatmul.bf16.gmra.mxu0 %v578
        %v663 = vpop.f32.mrf.mxu0
        %v664 = vadd.f32 %v599, %v663
        %v665 = vpop.f32.mrf.mxu0
        %v666 = vadd.f32 %v599, %v665
        %667 = vmatmul.bf16.gmra.mxu0 %v579
        %v668 = vpop.f32.mrf.mxu0
        %v669 = vadd.f32 %v599, %v668
        %v670 = vpop.f32.mrf.mxu0
        %v671 = vadd.f32 %v599, %v670
        %672 = vmatmul.bf16.gmra.mxu0 %v580
        %v673 = vpop.f32.mrf.mxu0
        %v674 = vadd.f32 %v599, %v673
        %v675 = vpop.f32.mrf.mxu0
        %v676 = vadd.f32 %v599, %v675
        %677 = vdwg.mxu0
        %v678 = vmul.f32 %v659, %v659
        %v679 = vmul.f32 %v661, %v661
        %v680 = vmul.f32 %v664, %v664
        %v681 = vmul.f32 %v666, %v666
        %v682 = vmul.f32 %v669, %v669
        %v683 = vmul.f32 %v671, %v671
        %v684 = vmul.f32 %v674, %v674
        %v685 = vmul.f32 %v676, %v676
        %686 = vadd.xlane.f32.xlu0 %v678
        %v687 = vpop.xlane.xlu0 %686
        %688 = vadd.xlane.f32.xlu0 %v679
        %v689 = vpop.xlane.xlu0 %688
        %690 = vadd.xlane.f32.xlu0 %v680
        %v691 = vpop.xlane.xlu0 %690
        %692 = vadd.xlane.f32.xlu0 %v681
        %v693 = vpop.xlane.xlu0 %692
        %694 = vadd.xlane.f32.xlu0 %v682
        %v695 = vpop.xlane.xlu0 %694
        %696 = vadd.xlane.f32.xlu0 %v683
        %v697 = vpop.xlane.xlu0 %696
        %698 = vadd.xlane.f32.xlu0 %v684
        %v699 = vpop.xlane.xlu0 %698
        %700 = vadd.xlane.f32.xlu0 %v685
        %v701 = vpop.xlane.xlu0 %700
        %v702 = vmax.f32 %v687, 1e-24
        %v703 = vmax.f32 %v689, 1e-24
        %v704 = vmax.f32 %v691, 1e-24
        %v705 = vmax.f32 %v693, 1e-24
        %v706 = vmax.f32 %v695, 1e-24
        %v707 = vmax.f32 %v697, 1e-24
        %v708 = vmax.f32 %v699, 1e-24
        %v709 = vmax.f32 %v701, 1e-24
        %v710 = vrsqrt.pop %v702
        %v711 = vmul.f32 %v710, %v702
        %v712 = vmul.f32 %v711, %v710
        %v713 = vmul.f32 0.5, %v712
        %v714 = vsub.f32 1.5, %v713
        %v715 = vmul.f32 %v710, %v714
        %vm716 = vweird.f32 %v702
        %vm717 = vweird.f32 %v710
        %vm718 = vmor %vm716, %vm717
        %v719 = vsel %vm718, %v710, %v715
        %v720 = vrsqrt.pop %v703
        %v721 = vmul.f32 %v720, %v703
        %v722 = vmul.f32 %v721, %v720
        %v723 = vmul.f32 0.5, %v722
        %v724 = vsub.f32 1.5, %v723
        %v725 = vmul.f32 %v720, %v724
        %vm726 = vweird.f32 %v703
        %vm727 = vweird.f32 %v720
        %vm728 = vmor %vm726, %vm727
        %v729 = vsel %vm728, %v720, %v725
        %v730 = vrsqrt.pop %v704
        %v731 = vmul.f32 %v730, %v704
        %v732 = vmul.f32 %v731, %v730
        %v733 = vmul.f32 0.5, %v732
        %v734 = vsub.f32 1.5, %v733
        %v735 = vmul.f32 %v730, %v734
        %vm736 = vweird.f32 %v704
        %vm737 = vweird.f32 %v730
        %vm738 = vmor %vm736, %vm737
        %v739 = vsel %vm738, %v730, %v735
        %v740 = vrsqrt.pop %v705
        %v741 = vmul.f32 %v740, %v705
        %v742 = vmul.f32 %v741, %v740
        %v743 = vmul.f32 0.5, %v742
        %v744 = vsub.f32 1.5, %v743
        %v745 = vmul.f32 %v740, %v744
        %vm746 = vweird.f32 %v705
        %vm747 = vweird.f32 %v740
        %vm748 = vmor %vm746, %vm747
        %v749 = vsel %vm748, %v740, %v745
        %v750 = vrsqrt.pop %v706
        %v751 = vmul.f32 %v750, %v706
        %v752 = vmul.f32 %v751, %v750
        %v753 = vmul.f32 0.5, %v752
        %v754 = vsub.f32 1.5, %v753
        %v755 = vmul.f32 %v750, %v754
        %vm756 = vweird.f32 %v706
        %vm757 = vweird.f32 %v750
        %vm758 = vmor %vm756, %vm757
        %v759 = vsel %vm758, %v750, %v755
        %v760 = vrsqrt.pop %v707
        %v761 = vmul.f32 %v760, %v707
        %v762 = vmul.f32 %v761, %v760
        %v763 = vmul.f32 0.5, %v762
        %v764 = vsub.f32 1.5, %v763
        %v765 = vmul.f32 %v760, %v764
        %vm766 = vweird.f32 %v707
        %vm767 = vweird.f32 %v760
        %vm768 = vmor %vm766, %vm767
        %v769 = vsel %vm768, %v760, %v765
        %v770 = vrsqrt.pop %v708
        %v771 = vmul.f32 %v770, %v708
        %v772 = vmul.f32 %v771, %v770
        %v773 = vmul.f32 0.5, %v772
        %v774 = vsub.f32 1.5, %v773
        %v775 = vmul.f32 %v770, %v774
        %vm776 = vweird.f32 %v708
        %vm777 = vweird.f32 %v770
        %vm778 = vmor %vm776, %vm777
        %v779 = vsel %vm778, %v770, %v775
        %v780 = vrsqrt.pop %v709
        %v781 = vmul.f32 %v780, %v709
        %v782 = vmul.f32 %v781, %v780
        %v783 = vmul.f32 0.5, %v782
        %v784 = vsub.f32 1.5, %v783
        %v785 = vmul.f32 %v780, %v784
        %vm786 = vweird.f32 %v709
        %vm787 = vweird.f32 %v780
        %vm788 = vmor %vm786, %vm787
        %v789 = vsel %vm788, %v780, %v785
        %v790 = vmul.f32 %v659, %v719
        %v791 = vmul.f32 %v661, %v729
        %v792 = vmul.f32 %v664, %v739
        %v793 = vmul.f32 %v666, %v749
        %v794 = vmul.f32 %v669, %v759
        %v795 = vmul.f32 %v671, %v769
        %v796 = vmul.f32 %v674, %v779
        %v797 = vmul.f32 %v676, %v789
        %798 = vst [vmem:[%s348] sm:$0xff] %v790
        %799 = vst [vmem:[%s348 + $0x8] sm:$0xff] %v791
        %800 = vst [vmem:[%s348 + $0x10] sm:$0xff] %v792
        %801 = vst [vmem:[%s348 + $0x18] sm:$0xff] %v793
        %802 = vst [vmem:[%s348 + $0x20] sm:$0xff] %v794
        %803 = vst [vmem:[%s348 + $0x28] sm:$0xff] %v795
        %804 = vst [vmem:[%s348 + $0x30] sm:$0xff] %v796
        %805 = vst [vmem:[%s348 + $0x38] sm:$0xff] %v797
        %s806 = sand.u32 %s186, 1
        %s807 = scalar_lea.sflag [#allocation4], %s806
        %s808 = sand.u32 %s186, 1
        %s809 = smul.addr %s808, 64
        %s810 = scalar_lea.vmem [#allocation10], %s809
        // Predicated region
        $region65: #{tpu_custom_call.1} parent=47 // pred_check
          %p811 = pneg %p196
        $region66: #{tpu_custom_call.1} parent=47 // pred_check_branch
          %813 = sbr.rel (%p811) target = $region68
        $region67: #{tpu_custom_call.1} parent=47 // pred_region
          %s814 = smul.u32 8, %s26
          %816 = vsyncadd %s807, 0
          %s817 = smul.addr %s814, 8
          %s818 = scalar_lea.hbm %s7, %s817
          %s819 = sshll.u32 %s810, 4
          %s820 = int_to_ptr.vmem [resolvable:$true] %s819
          %s821 = sshll.u32 %s818, 4
          %s822 = int_to_ptr.hbm [resolvable:$true] %s821
          %827 = dma.vmem_to_hbm [thread:$0]  %s820, 1024, %s822, %s807, 128, 128, 8
        $region68: #{tpu_custom_call.1} parent=47 // pred_fallthru
          _
      $region48: #{tpu_custom_call.1} parent=5 // pred_fallthru
        _
      %p828 = scmp.le.s32.totalorder 2, %s21
      // Predicated region
      $region69: #{tpu_custom_call.1} parent=5 // pred_check
        %p829 = pneg %p828
      $region70: #{tpu_custom_call.1} parent=5 // pred_check_branch
        %831 = sbr.rel (%p829) target = $region72
      $region71: #{tpu_custom_call.1} parent=5 // pred_region
        %s832 = ssub.s32 %s21, 2
        // Predicated region
        $region73: #{tpu_custom_call.1} parent=71 // pred_check
          %p833 = pneg %p202
        $region74: #{tpu_custom_call.1} parent=71 // pred_check_branch
          %835 = sbr.rel (%p833) target = $region76
        $region75: #{tpu_custom_call.1} parent=71 // pred_region
          %s836 = sand.u32 %s187, 1
          %s837 = scalar_lea.sflag [#allocation4], %s836
          %s838 = sand.u32 %s187, 1
          %s839 = smul.addr %s838, 64
          %s840 = scalar_lea.vmem [#allocation10], %s839
          %842 = dma.done %s837, 1024
        $region76: #{tpu_custom_call.1} parent=71 // pred_fallthru
          _
      $region72: #{tpu_custom_call.1} parent=5 // pred_fallthru
        _
    $region6: #{tpu_custom_call.1} parent=1 // loop_footer
      %s25 = sadd.s32 1, %s21
    $region7: #{tpu_custom_call.1} parent=1 // loop_footer_branch
      %20 = sbr.rel target = $region3
    $region8: #{tpu_custom_call.1} parent=1 // loop_exit
      _
    %843 = vsyncpa [#allocation3], 1
    %s844 = scalar_lea.sflag [#allocation3], 1
    %845 = vsyncpa %s844, 1
    %846 = vsyncpa [#allocation6], 1
    %847 = vsyncpa [#allocation9], 1
    %848 = vsyncpa [#allocation4], 1
    %s849 = scalar_lea.sflag [#allocation4], 1
    %850 = vsyncpa %s849, 1

</llo_original>
